<compile_context>
chip_gen: v7x
topology: tpu7x:2x2x1
jax: 0.10.0
libtpu: 0.0.40
codegen_flags: <defaults>
</compile_context>

<pallas_src>
import functools

import jax
import jax.numpy as jnp
import numpy as np
from jax.experimental import pallas as pl
from jax.experimental.pallas import tpu as pltpu


# ----------------------------------------------------------------------------
# Pallas kernel: one grid step processes one batch tile (grid = B // bt >= 2).
# ----------------------------------------------------------------------------
def gtb_kernel(x_ref, ln_ref,
               a1_wqkv, a1_bqkv, a1_wo, a1_bo,
               a2_wqkv, a2_bqkv, a2_wo, a2_bo,
               g_ref,
               ffw1_ref, ffb1_ref, ffw2_ref, ffb2_ref,
               o_ref,
               q_s, k_s, v_s, ctx_s,
               *, bt, seq, nhead):
    m, d = x_ref.shape            # m = bt * seq  (batch folded into matmul M)
    hd = d // nhead
    bh = bt * nhead
    cdt = ffw1_ref.dtype          # bf16 MXU operand dtype; accumulation stays f32
    eps = 1e-5

    x = x_ref[...]                # (m, d) f32
    ln = ln_ref[...]              # (4, d) f32: [ln1_w, ln1_b, ln2_w, ln2_b]

    def layernorm(v, w, b):
        mu = jnp.mean(v, axis=-1, keepdims=True)
        c = v - mu
        var = jnp.mean(c * c, axis=-1, keepdims=True)
        return c * jax.lax.rsqrt(var + eps) * w + b

    def mha(nx, wqkv_ref, bqkv_ref, wo_ref, bo_ref):
        # (1) fused QKV projection: ONE (m,d)@(d,3d) MXU matmul (+ f32 bias).
        #     1/sqrt(hd) is already folded into the q-third of wqkv/bqkv.
        qkv = jnp.dot(nx.astype(cdt), wqkv_ref[...],
                      preferred_element_type=jnp.float32) + bqkv_ref[...]

        # (2) head split: token-major rows -> (head, batch)-major batch for the
        #     attention einsums, via per-head slice->store into bf16 VMEM
        #     scratch (replaces the unsupported major-dim transpose; only
        #     O(m*d) data moves, no broadcasts, no matmuls).
        for h in range(nhead):
            q_s[h] = qkv[:, h * hd:(h + 1) * hd].astype(cdt)
            k_s[h] = qkv[:, d + h * hd:d + (h + 1) * hd].astype(cdt)
            v_s[h] = qkv[:, 2 * d + h * hd:2 * d + (h + 1) * hd].astype(cdt)
        q = q_s[...].reshape(bh, seq, hd)
        k = k_s[...].reshape(bh, seq, hd)
        v = v_s[...].reshape(bh, seq, hd)

        # (3) scores + softmax: f32 math, bf16 MXU operands, EUP approx recip.
        s = jnp.einsum('bqe,bke->bqk', q, k, preferred_element_type=jnp.float32)
        s = s - jnp.max(s, axis=-1, keepdims=True)
        p = jnp.exp(s)
        p = p * pl.reciprocal(jnp.sum(p, axis=-1, keepdims=True), approx=True)

        ctx = jnp.einsum('bqk,bke->bqe', p.astype(cdt), v,
                         preferred_element_type=jnp.float32)   # (bh, seq, hd) f32

        # (4) head merge back to token-major (m, d) via lane slice-stores, then
        #     ONE (m,d)@(d,d) output projection (no per-head matmuls, no sum).
        ctx3 = ctx.reshape(nhead, m, hd)
        for h in range(nhead):
            ctx_s[:, h * hd:(h + 1) * hd] = ctx3[h]
        return jnp.dot(ctx_s[...].astype(cdt), wo_ref[...],
                       preferred_element_type=jnp.float32) + bo_ref[...]

    g = g_ref[0]                  # sigmoid(gate) precomputed on the host (SMEM)

    # branch 1 -> fold into the residual immediately (narrow f32 live ranges)
    a1 = mha(layernorm(x, ln[0:1], ln[1:2]), a1_wqkv, a1_bqkv, a1_wo, a1_bo)
    x1 = x + g * a1
    # branch 2 -> accumulate into x1
    a2 = mha(layernorm(x, ln[2:3], ln[3:4]), a2_wqkv, a2_bqkv, a2_wo, a2_bo)
    x1 = x1 + (1.0 - g) * a2

    # feed-forward on norm2(x1) (the module reuses norm2 here), residual add.
    nx3 = layernorm(x1, ln[2:3], ln[3:4])
    hid = jnp.dot(nx3.astype(cdt), ffw1_ref[...],
                  preferred_element_type=jnp.float32) + ffb1_ref[...]
    hid = jnp.maximum(hid, 0.0).astype(cdt)   # cast right after ReLU (halves hid)
    ff = jnp.dot(hid, ffw2_ref[...],
                 preferred_element_type=jnp.float32) + ffb2_ref[...]

    o_ref[...] = (x1 + ff).astype(o_ref.dtype)


# ----------------------------------------------------------------------------
# Host-side one-time parameter prep: fuse QKV, fold scale & sigmoid, cast bf16.
# ----------------------------------------------------------------------------
def prepare_params(p, nhead, compute_dtype=jnp.bfloat16):
    d = int(np.asarray(p["ln1_w"]).shape[-1])
    assert d % nhead == 0, "d_model must be divisible by nhead"
    hd = d // nhead
    scale = 1.0 / np.sqrt(hd)
    f32 = jnp.float32

    def attn(prefix):
        inw = jnp.asarray(p[f"{prefix}_in_w"], f32)               # (3d, d): [Wq;Wk;Wv]
        inb = jnp.asarray(p[f"{prefix}_in_b"], f32).reshape(-1)   # (3d,)
        outw = jnp.asarray(p[f"{prefix}_out_w"], f32)             # (d, d)
        outb = jnp.asarray(p[f"{prefix}_out_b"], f32).reshape(1, d)
        # fold 1/sqrt(hd) into Wq / bq (exact in f32), fuse Wq|Wk|Wv lane-dense.
        wq = inw[:d] * scale
        bq = inb[:d] * scale
        wqkv = jnp.concatenate([wq, inw[d:2 * d], inw[2 * d:]], axis=0).T  # (d, 3d)
        bqkv = jnp.concatenate([bq, inb[d:2 * d], inb[2 * d:]]).reshape(1, 3 * d)
        return dict(wqkv=wqkv.astype(compute_dtype), bqkv=bqkv,
                    wo=outw.T.astype(compute_dtype),               # (d, d)
                    bo=outb)

    ln = jnp.stack([jnp.asarray(p["ln1_w"], f32), jnp.asarray(p["ln1_b"], f32),
                    jnp.asarray(p["ln2_w"], f32), jnp.asarray(p["ln2_b"], f32)],
                   axis=0)                                          # (4, d)

    return {
        "ln": ln,
        "a1": attn("a1"),
        "a2": attn("a2"),
        "gate_sig": jax.nn.sigmoid(jnp.asarray(p["gate"], f32)).reshape(1),
        "ff_w1": jnp.asarray(p["ff_w1"], f32).T.astype(compute_dtype),   # (d, 4d)
        "ff_b1": jnp.asarray(p["ff_b1"], f32).reshape(1, -1),
        "ff_w2": jnp.asarray(p["ff_w2"], f32).T.astype(compute_dtype),   # (4d, d)
        "ff_b2": jnp.asarray(p["ff_b2"], f32).reshape(1, -1),
    }


# ----------------------------------------------------------------------------
# Wrapper
# ----------------------------------------------------------------------------
def _pick_batch_tile(B):
    # Aim for grid >= 2 so the "parallel" axis can shard across v7x's two
    # TensorCores and BlockSpec double-buffering overlaps activation DMA.
    if B < 2:
        return B
    for bt in range(B // 2, 0, -1):
        if B % bt == 0:
            return bt
    return B


def gated_transformer_block(x, kp, nhead, *, batch_tile=None):
    if x.ndim == 2:                       # matches the module's unsqueeze(1)
        x = x[:, None, :]
    B, S, D = x.shape
    bt = _pick_batch_tile(B) if batch_tile is None else batch_tile
    assert B % bt == 0
    hd = D // nhead
    m = bt * S
    cdt = kp["ff_w1"].dtype

    x2d = x.reshape(B * S, D)             # fold batch into the matmul M dimension

    a1, a2 = kp["a1"], kp["a2"]
    weights = (kp["ln"],
               a1["wqkv"], a1["bqkv"], a1["wo"], a1["bo"],
               a2["wqkv"], a2["bqkv"], a2["wo"], a2["bo"])
    ffn = (kp["ff_w1"], kp["ff_b1"], kp["ff_w2"], kp["ff_b2"])

    def const_spec(a):
        nd = a.ndim
        # TODO(synk): single-buffer these grid-invariant weights
        # (pipeline_mode=pl.Buffered(1)) to halve weight VMEM on v7x.
        return pl.BlockSpec(a.shape, lambda i, _nd=nd: (0,) * _nd)

    in_specs = [pl.BlockSpec((m, D), lambda i: (i, 0))]
    in_specs += [const_spec(a) for a in weights]
    in_specs += [pl.BlockSpec(memory_space=pltpu.MemorySpace.SMEM)]   # sigmoid(gate)
    in_specs += [const_spec(a) for a in ffn]

    out = pl.pallas_call(
        functools.partial(gtb_kernel, bt=bt, seq=S, nhead=nhead),
        out_shape=jax.ShapeDtypeStruct((B * S, D), x.dtype),
        grid=(B // bt,),
        in_specs=in_specs,
        out_specs=pl.BlockSpec((m, D), lambda i: (i, 0)),
        scratch_shapes=[
            pltpu.VMEM((nhead, m, hd), cdt),    # q  (head-major, bf16)
            pltpu.VMEM((nhead, m, hd), cdt),    # k
            pltpu.VMEM((nhead, m, hd), cdt),    # v
            pltpu.VMEM((m, D), jnp.float32),    # merged attention context
        ],
        compiler_params=pltpu.CompilerParams(
            dimension_semantics=("parallel",),          # megacore-shard batch tiles
            vmem_limit_bytes=48 * 1024 * 1024),         # sized for v7x's 64 MiB VMEM
    )(x2d, *weights, kp["gate_sig"], *ffn)
    return out.reshape(B, S, D)


# ----------------------------------------------------------------------------
# Pure-JAX reference (mirrors the PyTorch forward in eval mode, f32 throughout)
# ----------------------------------------------------------------------------
def _layernorm_ref(x, w, b, eps=1e-5):
    mu = x.mean(-1, keepdims=True)
    var = ((x - mu) ** 2).mean(-1, keepdims=True)
    return (x - mu) / jnp.sqrt(var + eps) * w + b


def _mha_ref(x, inw, inb, ow, ob, nhead):
    B, S, D = x.shape
    hd = D // nhead
    qkv = x @ inw.T + inb
    q, k, v = qkv[..., :D], qkv[..., D:2 * D], qkv[..., 2 * D:]
    split = lambda t: t.reshape(B, S, nhead, hd).transpose(0, 2, 1, 3)
    q, k, v = split(q), split(k), split(v)
    s = (q @ k.transpose(0, 1, 3, 2)) / jnp.sqrt(jnp.float32(hd))
    p = jax.nn.softmax(s, axis=-1)
    o = (p @ v).transpose(0, 2, 1, 3).reshape(B, S, D)
    return o @ ow.T + ob


def reference(x, p, nhead):
    nx1 = _layernorm_ref(x, p["ln1_w"], p["ln1_b"])
    a1 = _mha_ref(nx1, p["a1_in_w"], p["a1_in_b"], p["a1_out_w"], p["a1_out_b"], nhead)
    nx2 = _layernorm_ref(x, p["ln2_w"], p["ln2_b"])
    a2 = _mha_ref(nx2, p["a2_in_w"], p["a2_in_b"], p["a2_out_w"], p["a2_out_b"], nhead)
    g = jax.nn.sigmoid(p["gate"][0])
    x1 = x + g * a1 + (1 - g) * a2
    nx3 = _layernorm_ref(x1, p["ln2_w"], p["ln2_b"])
    hid = jnp.maximum(nx3 @ p["ff_w1"].T + p["ff_b1"], 0.0)
    ff = hid @ p["ff_w2"].T + p["ff_b2"]
    return x1 + ff


# ----------------------------------------------------------------------------
# Main
# ----------------------------------------------------------------------------
if __name__ == "__main__":
    B, S, D, NHEAD = 2, 8, 32, 4
    key = jax.random.PRNGKey(0)
    ks = jax.random.split(key, 13)

    def rnd(k, shape, scale=0.1):
        return scale * jax.random.normal(k, shape, dtype=jnp.float32)

    # Raw parameters in PyTorch layout (out_features, in_features), 1-D biases.
    raw = {
        "ln1_w": jnp.ones((D,), jnp.float32), "ln1_b": jnp.zeros((D,), jnp.float32),
        "ln2_w": jnp.ones((D,), jnp.float32), "ln2_b": jnp.zeros((D,), jnp.float32),
        "a1_in_w": rnd(ks[0], (3 * D, D)), "a1_in_b": rnd(ks[1], (3 * D,)),
        "a1_out_w": rnd(ks[2], (D, D)), "a1_out_b": rnd(ks[3], (D,)),
        "a2_in_w": rnd(ks[4], (3 * D, D)), "a2_in_b": rnd(ks[5], (3 * D,)),
        "a2_out_w": rnd(ks[6], (D, D)), "a2_out_b": rnd(ks[7], (D,)),
        "gate": jnp.zeros((1,), jnp.float32),          # PyTorch init -> sigmoid = 0.5
        "ff_w1": rnd(ks[8], (4 * D, D)), "ff_b1": rnd(ks[9], (4 * D,)),
        "ff_w2": rnd(ks[10], (D, 4 * D)), "ff_b2": rnd(ks[11], (D,)),
    }

    x = jax.random.normal(ks[12], (B, S, D), dtype=jnp.float32)

    kparams = prepare_params(raw, NHEAD, compute_dtype=jnp.bfloat16)
    out = gated_transformer_block(x, kparams, NHEAD)
    out = jax.block_until_ready(out)

    ref = reference(x, raw, NHEAD)
    # bf16 MXU operands + approx-reciprocal softmax -> looser tolerance than f32.
    np.testing.assert_allclose(np.asarray(out), np.asarray(ref), rtol=3e-2, atol=3e-2)

    print("KERNEL_OK")
</pallas_src>

<mosaic_0001>
module attributes {stable_mosaic.version = 11 : i64} {
  func.func @gtb_kernel(%arg0: i32, %arg1: memref<8x32xf32, #tpu.memory_space<vmem>>, %arg2: memref<4x32xf32, #tpu.memory_space<vmem>>, %arg3: memref<32x96xbf16, #tpu.memory_space<vmem>>, %arg4: memref<1x96xf32, #tpu.memory_space<vmem>>, %arg5: memref<32x32xbf16, #tpu.memory_space<vmem>>, %arg6: memref<1x32xf32, #tpu.memory_space<vmem>>, %arg7: memref<32x96xbf16, #tpu.memory_space<vmem>>, %arg8: memref<1x96xf32, #tpu.memory_space<vmem>>, %arg9: memref<32x32xbf16, #tpu.memory_space<vmem>>, %arg10: memref<1x32xf32, #tpu.memory_space<vmem>>, %arg11: memref<1xf32, #tpu.memory_space<smem>>, %arg12: memref<32x128xbf16, #tpu.memory_space<vmem>>, %arg13: memref<1x128xf32, #tpu.memory_space<vmem>>, %arg14: memref<128x32xbf16, #tpu.memory_space<vmem>>, %arg15: memref<1x32xf32, #tpu.memory_space<vmem>>, %arg16: memref<8x32xf32, #tpu.memory_space<vmem>>, %arg17: memref<4x8x8xbf16, #tpu.memory_space<vmem>>, %arg18: memref<4x8x8xbf16, #tpu.memory_space<vmem>>, %arg19: memref<4x8x8xbf16, #tpu.memory_space<vmem>>, %arg20: memref<8x32xf32, #tpu.memory_space<vmem>>) attributes {dimension_semantics = [#tpu.dimension_semantics<parallel>], iteration_bounds = array<i64: 2>, scalar_prefetch = 0 : i64, scratch_operands = 4 : i64, tpu.core_type = #tpu.core_type<tc>, window_params = [{transform_indices = @transform_0, window_bounds = array<i64: 8, 32>}, {pipeline_mode = #tpu.pipeline_mode<synchronous>, transform_indices = @transform_1, window_bounds = array<i64: 4, 32>}, {pipeline_mode = #tpu.pipeline_mode<synchronous>, transform_indices = @transform_2, window_bounds = array<i64: 32, 96>}, {pipeline_mode = #tpu.pipeline_mode<synchronous>, transform_indices = @transform_3, window_bounds = array<i64: 1, 96>}, {pipeline_mode = #tpu.pipeline_mode<synchronous>, transform_indices = @transform_4, window_bounds = array<i64: 32, 32>}, {pipeline_mode = #tpu.pipeline_mode<synchronous>, transform_indices = @transform_5, window_bounds = array<i64: 1, 32>}, {pipeline_mode = #tpu.pipeline_mode<synchronous>, transform_indices = @transform_6, window_bounds = array<i64: 32, 96>}, {pipeline_mode = #tpu.pipeline_mode<synchronous>, transform_indices = @transform_7, window_bounds = array<i64: 1, 96>}, {pipeline_mode = #tpu.pipeline_mode<synchronous>, transform_indices = @transform_8, window_bounds = array<i64: 32, 32>}, {pipeline_mode = #tpu.pipeline_mode<synchronous>, transform_indices = @transform_9, window_bounds = array<i64: 1, 32>}, {transform_indices = @transform_10, window_bounds = array<i64: 1>}, {pipeline_mode = #tpu.pipeline_mode<synchronous>, transform_indices = @transform_11, window_bounds = array<i64: 32, 128>}, {pipeline_mode = #tpu.pipeline_mode<synchronous>, transform_indices = @transform_12, window_bounds = array<i64: 1, 128>}, {pipeline_mode = #tpu.pipeline_mode<synchronous>, transform_indices = @transform_13, window_bounds = array<i64: 128, 32>}, {pipeline_mode = #tpu.pipeline_mode<synchronous>, transform_indices = @transform_14, window_bounds = array<i64: 1, 32>}, {transform_indices = @transform_15, window_bounds = array<i64: 8, 32>}]} {
    %c0 = arith.constant 0 : index
    %c0_0 = arith.constant 0 : index
    %0 = vector.load %arg1[%c0, %c0_0] : memref<8x32xf32, #tpu.memory_space<vmem>>, vector<8x32xf32>
    %c0_1 = arith.constant 0 : index
    %c0_2 = arith.constant 0 : index
    %1 = vector.load %arg2[%c0_1, %c0_2] : memref<4x32xf32, #tpu.memory_space<vmem>>, vector<4x32xf32>
    %c0_3 = arith.constant 0 : index
    %2 = memref.load %arg11[%c0_3] : memref<1xf32, #tpu.memory_space<smem>>
    %3 = vector.extract_strided_slice %1 {offsets = [0, 0], sizes = [1, 32], strides = [1, 1]} : vector<4x32xf32> to vector<1x32xf32>
    %4 = vector.extract_strided_slice %1 {offsets = [1, 0], sizes = [1, 32], strides = [1, 1]} : vector<4x32xf32> to vector<1x32xf32>
    %cst = arith.constant dense<0.000000e+00> : vector<8xf32>
    %5 = vector.multi_reduction <add>, %0, %cst [1] : vector<8x32xf32> to vector<8xf32>
    %6 = vector.shape_cast %5 : vector<8xf32> to vector<8x1xf32>
    %cst_4 = arith.constant 3.200000e+01 : f32
    %7 = vector.broadcast %cst_4 : f32 to vector<8x1xf32>
    %8 = arith.divf %6, %7 : vector<8x1xf32>
    %9 = vector.broadcast %8 : vector<8x1xf32> to vector<8x32xf32>
    %10 = arith.subf %0, %9 : vector<8x32xf32>
    %11 = arith.mulf %10, %10 : vector<8x32xf32>
    %cst_5 = arith.constant dense<0.000000e+00> : vector<8xf32>
    %12 = vector.multi_reduction <add>, %11, %cst_5 [1] : vector<8x32xf32> to vector<8xf32>
    %13 = vector.shape_cast %12 : vector<8xf32> to vector<8x1xf32>
    %cst_6 = arith.constant 3.200000e+01 : f32
    %14 = vector.broadcast %cst_6 : f32 to vector<8x1xf32>
    %15 = arith.divf %13, %14 : vector<8x1xf32>
    %cst_7 = arith.constant 9.99999974E-6 : f32
    %16 = vector.broadcast %cst_7 : f32 to vector<8x1xf32>
    %17 = arith.addf %15, %16 : vector<8x1xf32>
    %18 = math.rsqrt %17 : vector<8x1xf32>
    %19 = vector.broadcast %18 : vector<8x1xf32> to vector<8x32xf32>
    %20 = arith.mulf %10, %19 : vector<8x32xf32>
    %21 = vector.broadcast %3 : vector<1x32xf32> to vector<8x32xf32>
    %22 = arith.mulf %20, %21 : vector<8x32xf32>
    %23 = vector.broadcast %4 : vector<1x32xf32> to vector<8x32xf32>
    %24 = arith.addf %22, %23 : vector<8x32xf32>
    %25 = arith.truncf %24 : vector<8x32xf32> to vector<8x32xbf16>
    %c0_8 = arith.constant 0 : index
    %c0_9 = arith.constant 0 : index
    %26 = vector.load %arg3[%c0_8, %c0_9] : memref<32x96xbf16, #tpu.memory_space<vmem>>, vector<32x96xbf16>
    %cst_10 = arith.constant dense<0.000000e+00> : vector<8x96xf32>
    %27 = tpu.matmul %25, %26, %cst_10 {dimension_numbers = #tpu.dot_dimension_numbers<[1], [0], [0], [1], [0, 0, 1, 1], [], []>} : vector<8x32xbf16>, vector<32x96xbf16>, vector<8x96xf32> -> vector<8x96xf32>
    %c0_11 = arith.constant 0 : index
    %c0_12 = arith.constant 0 : index
    %28 = vector.load %arg4[%c0_11, %c0_12] : memref<1x96xf32, #tpu.memory_space<vmem>>, vector<1x96xf32>
    %29 = vector.broadcast %28 : vector<1x96xf32> to vector<8x96xf32>
    %30 = arith.addf %27, %29 : vector<8x96xf32>
    %31 = vector.extract_strided_slice %30 {offsets = [0, 0], sizes = [8, 8], strides = [1, 1]} : vector<8x96xf32> to vector<8x8xf32>
    %32 = arith.truncf %31 : vector<8x8xf32> to vector<8x8xbf16>
    %c0_13 = arith.constant 0 : index
    %c0_14 = arith.constant 0 : index
    %c0_15 = arith.constant 0 : index
    %33 = vector.load %arg17[%c0_13, %c0_14, %c0_15] : memref<4x8x8xbf16, #tpu.memory_space<vmem>>, vector<1x8x8xbf16>
    %34 = vector.shape_cast %33 : vector<1x8x8xbf16> to vector<8x8xbf16>
    %35 = vector.shape_cast %32 : vector<8x8xbf16> to vector<1x8x8xbf16>
    tpu.vector_store %arg17[%c0_13, %c0_14, %c0_15], %35 {strides = array<i32>} : memref<4x8x8xbf16, #tpu.memory_space<vmem>>, vector<1x8x8xbf16>,
    %36 = vector.extract_strided_slice %30 {offsets = [0, 32], sizes = [8, 8], strides = [1, 1]} : vector<8x96xf32> to vector<8x8xf32>
    %37 = arith.truncf %36 : vector<8x8xf32> to vector<8x8xbf16>
    %c0_16 = arith.constant 0 : index
    %c0_17 = arith.constant 0 : index
    %c0_18 = arith.constant 0 : index
    %38 = vector.load %arg18[%c0_16, %c0_17, %c0_18] : memref<4x8x8xbf16, #tpu.memory_space<vmem>>, vector<1x8x8xbf16>
    %39 = vector.shape_cast %38 : vector<1x8x8xbf16> to vector<8x8xbf16>
    %40 = vector.shape_cast %37 : vector<8x8xbf16> to vector<1x8x8xbf16>
    tpu.vector_store %arg18[%c0_16, %c0_17, %c0_18], %40 {strides = array<i32>} : memref<4x8x8xbf16, #tpu.memory_space<vmem>>, vector<1x8x8xbf16>,
    %41 = vector.extract_strided_slice %30 {offsets = [0, 64], sizes = [8, 8], strides = [1, 1]} : vector<8x96xf32> to vector<8x8xf32>
    %42 = arith.truncf %41 : vector<8x8xf32> to vector<8x8xbf16>
    %c0_19 = arith.constant 0 : index
    %c0_20 = arith.constant 0 : index
    %c0_21 = arith.constant 0 : index
    %43 = vector.load %arg19[%c0_19, %c0_20, %c0_21] : memref<4x8x8xbf16, #tpu.memory_space<vmem>>, vector<1x8x8xbf16>
    %44 = vector.shape_cast %43 : vector<1x8x8xbf16> to vector<8x8xbf16>
    %45 = vector.shape_cast %42 : vector<8x8xbf16> to vector<1x8x8xbf16>
    tpu.vector_store %arg19[%c0_19, %c0_20, %c0_21], %45 {strides = array<i32>} : memref<4x8x8xbf16, #tpu.memory_space<vmem>>, vector<1x8x8xbf16>,
    %46 = vector.extract_strided_slice %30 {offsets = [0, 8], sizes = [8, 8], strides = [1, 1]} : vector<8x96xf32> to vector<8x8xf32>
    %47 = arith.truncf %46 : vector<8x8xf32> to vector<8x8xbf16>
    %c1 = arith.constant 1 : index
    %c0_22 = arith.constant 0 : index
    %c0_23 = arith.constant 0 : index
    %48 = vector.load %arg17[%c1, %c0_22, %c0_23] : memref<4x8x8xbf16, #tpu.memory_space<vmem>>, vector<1x8x8xbf16>
    %49 = vector.shape_cast %48 : vector<1x8x8xbf16> to vector<8x8xbf16>
    %50 = vector.shape_cast %47 : vector<8x8xbf16> to vector<1x8x8xbf16>
    tpu.vector_store %arg17[%c1, %c0_22, %c0_23], %50 {strides = array<i32>} : memref<4x8x8xbf16, #tpu.memory_space<vmem>>, vector<1x8x8xbf16>,
    %51 = vector.extract_strided_slice %30 {offsets = [0, 40], sizes = [8, 8], strides = [1, 1]} : vector<8x96xf32> to vector<8x8xf32>
    %52 = arith.truncf %51 : vector<8x8xf32> to vector<8x8xbf16>
    %c1_24 = arith.constant 1 : index
    %c0_25 = arith.constant 0 : index
    %c0_26 = arith.constant 0 : index
    %53 = vector.load %arg18[%c1_24, %c0_25, %c0_26] : memref<4x8x8xbf16, #tpu.memory_space<vmem>>, vector<1x8x8xbf16>
    %54 = vector.shape_cast %53 : vector<1x8x8xbf16> to vector<8x8xbf16>
    %55 = vector.shape_cast %52 : vector<8x8xbf16> to vector<1x8x8xbf16>
    tpu.vector_store %arg18[%c1_24, %c0_25, %c0_26], %55 {strides = array<i32>} : memref<4x8x8xbf16, #tpu.memory_space<vmem>>, vector<1x8x8xbf16>,
    %56 = vector.extract_strided_slice %30 {offsets = [0, 72], sizes = [8, 8], strides = [1, 1]} : vector<8x96xf32> to vector<8x8xf32>
    %57 = arith.truncf %56 : vector<8x8xf32> to vector<8x8xbf16>
    %c1_27 = arith.constant 1 : index
    %c0_28 = arith.constant 0 : index
    %c0_29 = arith.constant 0 : index
    %58 = vector.load %arg19[%c1_27, %c0_28, %c0_29] : memref<4x8x8xbf16, #tpu.memory_space<vmem>>, vector<1x8x8xbf16>
    %59 = vector.shape_cast %58 : vector<1x8x8xbf16> to vector<8x8xbf16>
    %60 = vector.shape_cast %57 : vector<8x8xbf16> to vector<1x8x8xbf16>
    tpu.vector_store %arg19[%c1_27, %c0_28, %c0_29], %60 {strides = array<i32>} : memref<4x8x8xbf16, #tpu.memory_space<vmem>>, vector<1x8x8xbf16>,
    %61 = vector.extract_strided_slice %30 {offsets = [0, 16], sizes = [8, 8], strides = [1, 1]} : vector<8x96xf32> to vector<8x8xf32>
    %62 = arith.truncf %61 : vector<8x8xf32> to vector<8x8xbf16>
    %c2 = arith.constant 2 : index
    %c0_30 = arith.constant 0 : index
    %c0_31 = arith.constant 0 : index
    %63 = vector.load %arg17[%c2, %c0_30, %c0_31] : memref<4x8x8xbf16, #tpu.memory_space<vmem>>, vector<1x8x8xbf16>
    %64 = vector.shape_cast %63 : vector<1x8x8xbf16> to vector<8x8xbf16>
    %65 = vector.shape_cast %62 : vector<8x8xbf16> to vector<1x8x8xbf16>
    tpu.vector_store %arg17[%c2, %c0_30, %c0_31], %65 {strides = array<i32>} : memref<4x8x8xbf16, #tpu.memory_space<vmem>>, vector<1x8x8xbf16>,
    %66 = vector.extract_strided_slice %30 {offsets = [0, 48], sizes = [8, 8], strides = [1, 1]} : vector<8x96xf32> to vector<8x8xf32>
    %67 = arith.truncf %66 : vector<8x8xf32> to vector<8x8xbf16>
    %c2_32 = arith.constant 2 : index
    %c0_33 = arith.constant 0 : index
    %c0_34 = arith.constant 0 : index
    %68 = vector.load %arg18[%c2_32, %c0_33, %c0_34] : memref<4x8x8xbf16, #tpu.memory_space<vmem>>, vector<1x8x8xbf16>
    %69 = vector.shape_cast %68 : vector<1x8x8xbf16> to vector<8x8xbf16>
    %70 = vector.shape_cast %67 : vector<8x8xbf16> to vector<1x8x8xbf16>
    tpu.vector_store %arg18[%c2_32, %c0_33, %c0_34], %70 {strides = array<i32>} : memref<4x8x8xbf16, #tpu.memory_space<vmem>>, vector<1x8x8xbf16>,
    %71 = vector.extract_strided_slice %30 {offsets = [0, 80], sizes = [8, 8], strides = [1, 1]} : vector<8x96xf32> to vector<8x8xf32>
    %72 = arith.truncf %71 : vector<8x8xf32> to vector<8x8xbf16>
    %c2_35 = arith.constant 2 : index
    %c0_36 = arith.constant 0 : index
    %c0_37 = arith.constant 0 : index
    %73 = vector.load %arg19[%c2_35, %c0_36, %c0_37] : memref<4x8x8xbf16, #tpu.memory_space<vmem>>, vector<1x8x8xbf16>
    %74 = vector.shape_cast %73 : vector<1x8x8xbf16> to vector<8x8xbf16>
    %75 = vector.shape_cast %72 : vector<8x8xbf16> to vector<1x8x8xbf16>
    tpu.vector_store %arg19[%c2_35, %c0_36, %c0_37], %75 {strides = array<i32>} : memref<4x8x8xbf16, #tpu.memory_space<vmem>>, vector<1x8x8xbf16>,
    %76 = vector.extract_strided_slice %30 {offsets = [0, 24], sizes = [8, 8], strides = [1, 1]} : vector<8x96xf32> to vector<8x8xf32>
    %77 = arith.truncf %76 : vector<8x8xf32> to vector<8x8xbf16>
    %c3 = arith.constant 3 : index
    %c0_38 = arith.constant 0 : index
    %c0_39 = arith.constant 0 : index
    %78 = vector.load %arg17[%c3, %c0_38, %c0_39] : memref<4x8x8xbf16, #tpu.memory_space<vmem>>, vector<1x8x8xbf16>
    %79 = vector.shape_cast %78 : vector<1x8x8xbf16> to vector<8x8xbf16>
    %80 = vector.shape_cast %77 : vector<8x8xbf16> to vector<1x8x8xbf16>
    tpu.vector_store %arg17[%c3, %c0_38, %c0_39], %80 {strides = array<i32>} : memref<4x8x8xbf16, #tpu.memory_space<vmem>>, vector<1x8x8xbf16>,
    %81 = vector.extract_strided_slice %30 {offsets = [0, 56], sizes = [8, 8], strides = [1, 1]} : vector<8x96xf32> to vector<8x8xf32>
    %82 = arith.truncf %81 : vector<8x8xf32> to vector<8x8xbf16>
    %c3_40 = arith.constant 3 : index
    %c0_41 = arith.constant 0 : index
    %c0_42 = arith.constant 0 : index
    %83 = vector.load %arg18[%c3_40, %c0_41, %c0_42] : memref<4x8x8xbf16, #tpu.memory_space<vmem>>, vector<1x8x8xbf16>
    %84 = vector.shape_cast %83 : vector<1x8x8xbf16> to vector<8x8xbf16>
    %85 = vector.shape_cast %82 : vector<8x8xbf16> to vector<1x8x8xbf16>
    tpu.vector_store %arg18[%c3_40, %c0_41, %c0_42], %85 {strides = array<i32>} : memref<4x8x8xbf16, #tpu.memory_space<vmem>>, vector<1x8x8xbf16>,
    %86 = vector.extract_strided_slice %30 {offsets = [0, 88], sizes = [8, 8], strides = [1, 1]} : vector<8x96xf32> to vector<8x8xf32>
    %87 = arith.truncf %86 : vector<8x8xf32> to vector<8x8xbf16>
    %c3_43 = arith.constant 3 : index
    %c0_44 = arith.constant 0 : index
    %c0_45 = arith.constant 0 : index
    %88 = vector.load %arg19[%c3_43, %c0_44, %c0_45] : memref<4x8x8xbf16, #tpu.memory_space<vmem>>, vector<1x8x8xbf16>
    %89 = vector.shape_cast %88 : vector<1x8x8xbf16> to vector<8x8xbf16>
    %90 = vector.shape_cast %87 : vector<8x8xbf16> to vector<1x8x8xbf16>
    tpu.vector_store %arg19[%c3_43, %c0_44, %c0_45], %90 {strides = array<i32>} : memref<4x8x8xbf16, #tpu.memory_space<vmem>>, vector<1x8x8xbf16>,
    %c0_46 = arith.constant 0 : index
    %c0_47 = arith.constant 0 : index
    %c0_48 = arith.constant 0 : index
    %91 = vector.load %arg17[%c0_46, %c0_47, %c0_48] : memref<4x8x8xbf16, #tpu.memory_space<vmem>>, vector<4x8x8xbf16>
    %c0_49 = arith.constant 0 : index
    %c0_50 = arith.constant 0 : index
    %c0_51 = arith.constant 0 : index
    %92 = vector.load %arg18[%c0_49, %c0_50, %c0_51] : memref<4x8x8xbf16, #tpu.memory_space<vmem>>, vector<4x8x8xbf16>
    %c0_52 = arith.constant 0 : index
    %c0_53 = arith.constant 0 : index
    %c0_54 = arith.constant 0 : index
    %93 = vector.load %arg19[%c0_52, %c0_53, %c0_54] : memref<4x8x8xbf16, #tpu.memory_space<vmem>>, vector<4x8x8xbf16>
    "tpu.trace_start"() <{level = 10 : i32, message = "bqe,bke->bqk"}> : () -> ()
    %cst_55 = arith.constant dense<0.000000e+00> : vector<4x8x8xf32>
    %94 = tpu.matmul %91, %92, %cst_55 {dimension_numbers = #tpu.dot_dimension_numbers<[2], [2], [1], [1], [0, 0, 0, 1, 1, 1], [0], [0]>} : vector<4x8x8xbf16>, vector<4x8x8xbf16>, vector<4x8x8xf32> -> vector<4x8x8xf32>
    "tpu.trace_stop"() : () -> ()
    %cst_56 = arith.constant dense<0xFF800000> : vector<4x8xf32>
    %95 = vector.multi_reduction <maximumf>, %94, %cst_56 [2] : vector<4x8x8xf32> to vector<4x8xf32>
    %96 = vector.shape_cast %95 : vector<4x8xf32> to vector<4x8x1xf32>
    %97 = vector.broadcast %96 : vector<4x8x1xf32> to vector<4x8x8xf32>
    %98 = arith.subf %94, %97 : vector<4x8x8xf32>
    %99 = math.exp %98 : vector<4x8x8xf32>
    %cst_57 = arith.constant dense<0.000000e+00> : vector<4x8xf32>
    %100 = vector.multi_reduction <add>, %99, %cst_57 [2] : vector<4x8x8xf32> to vector<4x8xf32>
    %101 = vector.shape_cast %100 : vector<4x8xf32> to vector<4x8x1xf32>
    %102 = tpu.reciprocal %101 {approx = true} : vector<4x8x1xf32> -> vector<4x8x1xf32>
    %103 = vector.broadcast %102 : vector<4x8x1xf32> to vector<4x8x8xf32>
    %104 = arith.mulf %99, %103 : vector<4x8x8xf32>
    %105 = arith.truncf %104 : vector<4x8x8xf32> to vector<4x8x8xbf16>
    "tpu.trace_start"() <{level = 10 : i32, message = "bqk,bke->bqe"}> : () -> ()
    %cst_58 = arith.constant dense<0.000000e+00> : vector<4x8x8xf32>
    %106 = tpu.matmul %105, %93, %cst_58 {dimension_numbers = #tpu.dot_dimension_numbers<[2], [1], [1], [2], [0, 0, 0, 1, 1, 2], [0], [0]>} : vector<4x8x8xbf16>, vector<4x8x8xbf16>, vector<4x8x8xf32> -> vector<4x8x8xf32>
    "tpu.trace_stop"() : () -> ()
    %107 = vector.extract_strided_slice %106 {offsets = [0, 0, 0], sizes = [1, 8, 8], strides = [1, 1, 1]} : vector<4x8x8xf32> to vector<1x8x8xf32>
    %108 = vector.shape_cast %107 : vector<1x8x8xf32> to vector<8x8xf32>
    %c0_59 = arith.constant 0 : index
    %c0_60 = arith.constant 0 : index
    %109 = vector.load %arg20[%c0_59, %c0_60] : memref<8x32xf32, #tpu.memory_space<vmem>>, vector<8x8xf32>
    tpu.vector_store %arg20[%c0_59, %c0_60], %108 {strides = array<i32>} : memref<8x32xf32, #tpu.memory_space<vmem>>, vector<8x8xf32>,
    %110 = vector.extract_strided_slice %106 {offsets = [1, 0, 0], sizes = [1, 8, 8], strides = [1, 1, 1]} : vector<4x8x8xf32> to vector<1x8x8xf32>
    %111 = vector.shape_cast %110 : vector<1x8x8xf32> to vector<8x8xf32>
    %c0_61 = arith.constant 0 : index
    %c8 = arith.constant 8 : index
    %112 = vector.load %arg20[%c0_61, %c8] : memref<8x32xf32, #tpu.memory_space<vmem>>, vector<8x8xf32>
    tpu.vector_store %arg20[%c0_61, %c8], %111 {strides = array<i32>} : memref<8x32xf32, #tpu.memory_space<vmem>>, vector<8x8xf32>,
    %113 = vector.extract_strided_slice %106 {offsets = [2, 0, 0], sizes = [1, 8, 8], strides = [1, 1, 1]} : vector<4x8x8xf32> to vector<1x8x8xf32>
    %114 = vector.shape_cast %113 : vector<1x8x8xf32> to vector<8x8xf32>
    %c0_62 = arith.constant 0 : index
    %c16 = arith.constant 16 : index
    %115 = vector.load %arg20[%c0_62, %c16] : memref<8x32xf32, #tpu.memory_space<vmem>>, vector<8x8xf32>
    tpu.vector_store %arg20[%c0_62, %c16], %114 {strides = array<i32>} : memref<8x32xf32, #tpu.memory_space<vmem>>, vector<8x8xf32>,
    %116 = vector.extract_strided_slice %106 {offsets = [3, 0, 0], sizes = [1, 8, 8], strides = [1, 1, 1]} : vector<4x8x8xf32> to vector<1x8x8xf32>
    %117 = vector.shape_cast %116 : vector<1x8x8xf32> to vector<8x8xf32>
    %c0_63 = arith.constant 0 : index
    %c24 = arith.constant 24 : index
    %118 = vector.load %arg20[%c0_63, %c24] : memref<8x32xf32, #tpu.memory_space<vmem>>, vector<8x8xf32>
    tpu.vector_store %arg20[%c0_63, %c24], %117 {strides = array<i32>} : memref<8x32xf32, #tpu.memory_space<vmem>>, vector<8x8xf32>,
    %c0_64 = arith.constant 0 : index
    %c0_65 = arith.constant 0 : index
    %119 = vector.load %arg20[%c0_64, %c0_65] : memref<8x32xf32, #tpu.memory_space<vmem>>, vector<8x32xf32>
    %120 = arith.truncf %119 : vector<8x32xf32> to vector<8x32xbf16>
    %c0_66 = arith.constant 0 : index
    %c0_67 = arith.constant 0 : index
    %121 = vector.load %arg5[%c0_66, %c0_67] : memref<32x32xbf16, #tpu.memory_space<vmem>>, vector<32x32xbf16>
    %cst_68 = arith.constant dense<0.000000e+00> : vector<8x32xf32>
    %122 = tpu.matmul %120, %121, %cst_68 {dimension_numbers = #tpu.dot_dimension_numbers<[1], [0], [0], [1], [0, 0, 1, 1], [], []>} : vector<8x32xbf16>, vector<32x32xbf16>, vector<8x32xf32> -> vector<8x32xf32>
    %c0_69 = arith.constant 0 : index
    %c0_70 = arith.constant 0 : index
    %123 = vector.load %arg6[%c0_69, %c0_70] : memref<1x32xf32, #tpu.memory_space<vmem>>, vector<1x32xf32>
    %124 = vector.broadcast %123 : vector<1x32xf32> to vector<8x32xf32>
    %125 = arith.addf %122, %124 : vector<8x32xf32>
    %126 = vector.broadcast %2 : f32 to vector<8x32xf32>
    %127 = arith.mulf %126, %125 : vector<8x32xf32>
    %128 = arith.addf %0, %127 : vector<8x32xf32>
    %129 = vector.extract_strided_slice %1 {offsets = [2, 0], sizes = [1, 32], strides = [1, 1]} : vector<4x32xf32> to vector<1x32xf32>
    %130 = vector.extract_strided_slice %1 {offsets = [3, 0], sizes = [1, 32], strides = [1, 1]} : vector<4x32xf32> to vector<1x32xf32>
    %cst_71 = arith.constant dense<0.000000e+00> : vector<8xf32>
    %131 = vector.multi_reduction <add>, %0, %cst_71 [1] : vector<8x32xf32> to vector<8xf32>
    %132 = vector.shape_cast %131 : vector<8xf32> to vector<8x1xf32>
    %cst_72 = arith.constant 3.200000e+01 : f32
    %133 = vector.broadcast %cst_72 : f32 to vector<8x1xf32>
    %134 = arith.divf %132, %133 : vector<8x1xf32>
    %135 = vector.broadcast %134 : vector<8x1xf32> to vector<8x32xf32>
    %136 = arith.subf %0, %135 : vector<8x32xf32>
    %137 = arith.mulf %136, %136 : vector<8x32xf32>
    %cst_73 = arith.constant dense<0.000000e+00> : vector<8xf32>
    %138 = vector.multi_reduction <add>, %137, %cst_73 [1] : vector<8x32xf32> to vector<8xf32>
    %139 = vector.shape_cast %138 : vector<8xf32> to vector<8x1xf32>
    %cst_74 = arith.constant 3.200000e+01 : f32
    %140 = vector.broadcast %cst_74 : f32 to vector<8x1xf32>
    %141 = arith.divf %139, %140 : vector<8x1xf32>
    %cst_75 = arith.constant 9.99999974E-6 : f32
    %142 = vector.broadcast %cst_75 : f32 to vector<8x1xf32>
    %143 = arith.addf %141, %142 : vector<8x1xf32>
    %144 = math.rsqrt %143 : vector<8x1xf32>
    %145 = vector.broadcast %144 : vector<8x1xf32> to vector<8x32xf32>
    %146 = arith.mulf %136, %145 : vector<8x32xf32>
    %147 = vector.broadcast %129 : vector<1x32xf32> to vector<8x32xf32>
    %148 = arith.mulf %146, %147 : vector<8x32xf32>
    %149 = vector.broadcast %130 : vector<1x32xf32> to vector<8x32xf32>
    %150 = arith.addf %148, %149 : vector<8x32xf32>
    %151 = arith.truncf %150 : vector<8x32xf32> to vector<8x32xbf16>
    %c0_76 = arith.constant 0 : index
    %c0_77 = arith.constant 0 : index
    %152 = vector.load %arg7[%c0_76, %c0_77] : memref<32x96xbf16, #tpu.memory_space<vmem>>, vector<32x96xbf16>
    %cst_78 = arith.constant dense<0.000000e+00> : vector<8x96xf32>
    %153 = tpu.matmul %151, %152, %cst_78 {dimension_numbers = #tpu.dot_dimension_numbers<[1], [0], [0], [1], [0, 0, 1, 1], [], []>} : vector<8x32xbf16>, vector<32x96xbf16>, vector<8x96xf32> -> vector<8x96xf32>
    %c0_79 = arith.constant 0 : index
    %c0_80 = arith.constant 0 : index
    %154 = vector.load %arg8[%c0_79, %c0_80] : memref<1x96xf32, #tpu.memory_space<vmem>>, vector<1x96xf32>
    %155 = vector.broadcast %154 : vector<1x96xf32> to vector<8x96xf32>
    %156 = arith.addf %153, %155 : vector<8x96xf32>
    %157 = vector.extract_strided_slice %156 {offsets = [0, 0], sizes = [8, 8], strides = [1, 1]} : vector<8x96xf32> to vector<8x8xf32>
    %158 = arith.truncf %157 : vector<8x8xf32> to vector<8x8xbf16>
    %c0_81 = arith.constant 0 : index
    %c0_82 = arith.constant 0 : index
    %c0_83 = arith.constant 0 : index
    %159 = vector.load %arg17[%c0_81, %c0_82, %c0_83] : memref<4x8x8xbf16, #tpu.memory_space<vmem>>, vector<1x8x8xbf16>
    %160 = vector.shape_cast %159 : vector<1x8x8xbf16> to vector<8x8xbf16>
    %161 = vector.shape_cast %158 : vector<8x8xbf16> to vector<1x8x8xbf16>
    tpu.vector_store %arg17[%c0_81, %c0_82, %c0_83], %161 {strides = array<i32>} : memref<4x8x8xbf16, #tpu.memory_space<vmem>>, vector<1x8x8xbf16>,
    %162 = vector.extract_strided_slice %156 {offsets = [0, 32], sizes = [8, 8], strides = [1, 1]} : vector<8x96xf32> to vector<8x8xf32>
    %163 = arith.truncf %162 : vector<8x8xf32> to vector<8x8xbf16>
    %c0_84 = arith.constant 0 : index
    %c0_85 = arith.constant 0 : index
    %c0_86 = arith.constant 0 : index
    %164 = vector.load %arg18[%c0_84, %c0_85, %c0_86] : memref<4x8x8xbf16, #tpu.memory_space<vmem>>, vector<1x8x8xbf16>
    %165 = vector.shape_cast %164 : vector<1x8x8xbf16> to vector<8x8xbf16>
    %166 = vector.shape_cast %163 : vector<8x8xbf16> to vector<1x8x8xbf16>
    tpu.vector_store %arg18[%c0_84, %c0_85, %c0_86], %166 {strides = array<i32>} : memref<4x8x8xbf16, #tpu.memory_space<vmem>>, vector<1x8x8xbf16>,
    %167 = vector.extract_strided_slice %156 {offsets = [0, 64], sizes = [8, 8], strides = [1, 1]} : vector<8x96xf32> to vector<8x8xf32>
    %168 = arith.truncf %167 : vector<8x8xf32> to vector<8x8xbf16>
    %c0_87 = arith.constant 0 : index
    %c0_88 = arith.constant 0 : index
    %c0_89 = arith.constant 0 : index
    %169 = vector.load %arg19[%c0_87, %c0_88, %c0_89] : memref<4x8x8xbf16, #tpu.memory_space<vmem>>, vector<1x8x8xbf16>
    %170 = vector.shape_cast %169 : vector<1x8x8xbf16> to vector<8x8xbf16>
    %171 = vector.shape_cast %168 : vector<8x8xbf16> to vector<1x8x8xbf16>
    tpu.vector_store %arg19[%c0_87, %c0_88, %c0_89], %171 {strides = array<i32>} : memref<4x8x8xbf16, #tpu.memory_space<vmem>>, vector<1x8x8xbf16>,
    %172 = vector.extract_strided_slice %156 {offsets = [0, 8], sizes = [8, 8], strides = [1, 1]} : vector<8x96xf32> to vector<8x8xf32>
    %173 = arith.truncf %172 : vector<8x8xf32> to vector<8x8xbf16>
    %c1_90 = arith.constant 1 : index
    %c0_91 = arith.constant 0 : index
    %c0_92 = arith.constant 0 : index
    %174 = vector.load %arg17[%c1_90, %c0_91, %c0_92] : memref<4x8x8xbf16, #tpu.memory_space<vmem>>, vector<1x8x8xbf16>
    %175 = vector.shape_cast %174 : vector<1x8x8xbf16> to vector<8x8xbf16>
    %176 = vector.shape_cast %173 : vector<8x8xbf16> to vector<1x8x8xbf16>
    tpu.vector_store %arg17[%c1_90, %c0_91, %c0_92], %176 {strides = array<i32>} : memref<4x8x8xbf16, #tpu.memory_space<vmem>>, vector<1x8x8xbf16>,
    %177 = vector.extract_strided_slice %156 {offsets = [0, 40], sizes = [8, 8], strides = [1, 1]} : vector<8x96xf32> to vector<8x8xf32>
    %178 = arith.truncf %177 : vector<8x8xf32> to vector<8x8xbf16>
    %c1_93 = arith.constant 1 : index
    %c0_94 = arith.constant 0 : index
    %c0_95 = arith.constant 0 : index
    %179 = vector.load %arg18[%c1_93, %c0_94, %c0_95] : memref<4x8x8xbf16, #tpu.memory_space<vmem>>, vector<1x8x8xbf16>
    %180 = vector.shape_cast %179 : vector<1x8x8xbf16> to vector<8x8xbf16>
    %181 = vector.shape_cast %178 : vector<8x8xbf16> to vector<1x8x8xbf16>
    tpu.vector_store %arg18[%c1_93, %c0_94, %c0_95], %181 {strides = array<i32>} : memref<4x8x8xbf16, #tpu.memory_space<vmem>>, vector<1x8x8xbf16>,
    %182 = vector.extract_strided_slice %156 {offsets = [0, 72], sizes = [8, 8], strides = [1, 1]} : vector<8x96xf32> to vector<8x8xf32>
    %183 = arith.truncf %182 : vector<8x8xf32> to vector<8x8xbf16>
    %c1_96 = arith.constant 1 : index
    %c0_97 = arith.constant 0 : index
    %c0_98 = arith.constant 0 : index
    %184 = vector.load %arg19[%c1_96, %c0_97, %c0_98] : memref<4x8x8xbf16, #tpu.memory_space<vmem>>, vector<1x8x8xbf16>
    %185 = vector.shape_cast %184 : vector<1x8x8xbf16> to vector<8x8xbf16>
    %186 = vector.shape_cast %183 : vector<8x8xbf16> to vector<1x8x8xbf16>
    tpu.vector_store %arg19[%c1_96, %c0_97, %c0_98], %186 {strides = array<i32>} : memref<4x8x8xbf16, #tpu.memory_space<vmem>>, vector<1x8x8xbf16>,
    %187 = vector.extract_strided_slice %156 {offsets = [0, 16], sizes = [8, 8], strides = [1, 1]} : vector<8x96xf32> to vector<8x8xf32>
    %188 = arith.truncf %187 : vector<8x8xf32> to vector<8x8xbf16>
    %c2_99 = arith.constant 2 : index
    %c0_100 = arith.constant 0 : index
    %c0_101 = arith.constant 0 : index
    %189 = vector.load %arg17[%c2_99, %c0_100, %c0_101] : memref<4x8x8xbf16, #tpu.memory_space<vmem>>, vector<1x8x8xbf16>
    %190 = vector.shape_cast %189 : vector<1x8x8xbf16> to vector<8x8xbf16>
    %191 = vector.shape_cast %188 : vector<8x8xbf16> to vector<1x8x8xbf16>
    tpu.vector_store %arg17[%c2_99, %c0_100, %c0_101], %191 {strides = array<i32>} : memref<4x8x8xbf16, #tpu.memory_space<vmem>>, vector<1x8x8xbf16>,
    %192 = vector.extract_strided_slice %156 {offsets = [0, 48], sizes = [8, 8], strides = [1, 1]} : vector<8x96xf32> to vector<8x8xf32>
    %193 = arith.truncf %192 : vector<8x8xf32> to vector<8x8xbf16>
    %c2_102 = arith.constant 2 : index
    %c0_103 = arith.constant 0 : index
    %c0_104 = arith.constant 0 : index
    %194 = vector.load %arg18[%c2_102, %c0_103, %c0_104] : memref<4x8x8xbf16, #tpu.memory_space<vmem>>, vector<1x8x8xbf16>
    %195 = vector.shape_cast %194 : vector<1x8x8xbf16> to vector<8x8xbf16>
    %196 = vector.shape_cast %193 : vector<8x8xbf16> to vector<1x8x8xbf16>
    tpu.vector_store %arg18[%c2_102, %c0_103, %c0_104], %196 {strides = array<i32>} : memref<4x8x8xbf16, #tpu.memory_space<vmem>>, vector<1x8x8xbf16>,
    %197 = vector.extract_strided_slice %156 {offsets = [0, 80], sizes = [8, 8], strides = [1, 1]} : vector<8x96xf32> to vector<8x8xf32>
    %198 = arith.truncf %197 : vector<8x8xf32> to vector<8x8xbf16>
    %c2_105 = arith.constant 2 : index
    %c0_106 = arith.constant 0 : index
    %c0_107 = arith.constant 0 : index
    %199 = vector.load %arg19[%c2_105, %c0_106, %c0_107] : memref<4x8x8xbf16, #tpu.memory_space<vmem>>, vector<1x8x8xbf16>
    %200 = vector.shape_cast %199 : vector<1x8x8xbf16> to vector<8x8xbf16>
    %201 = vector.shape_cast %198 : vector<8x8xbf16> to vector<1x8x8xbf16>
    tpu.vector_store %arg19[%c2_105, %c0_106, %c0_107], %201 {strides = array<i32>} : memref<4x8x8xbf16, #tpu.memory_space<vmem>>, vector<1x8x8xbf16>,
    %202 = vector.extract_strided_slice %156 {offsets = [0, 24], sizes = [8, 8], strides = [1, 1]} : vector<8x96xf32> to vector<8x8xf32>
    %203 = arith.truncf %202 : vector<8x8xf32> to vector<8x8xbf16>
    %c3_108 = arith.constant 3 : index
    %c0_109 = arith.constant 0 : index
    %c0_110 = arith.constant 0 : index
    %204 = vector.load %arg17[%c3_108, %c0_109, %c0_110] : memref<4x8x8xbf16, #tpu.memory_space<vmem>>, vector<1x8x8xbf16>
    %205 = vector.shape_cast %204 : vector<1x8x8xbf16> to vector<8x8xbf16>
    %206 = vector.shape_cast %203 : vector<8x8xbf16> to vector<1x8x8xbf16>
    tpu.vector_store %arg17[%c3_108, %c0_109, %c0_110], %206 {strides = array<i32>} : memref<4x8x8xbf16, #tpu.memory_space<vmem>>, vector<1x8x8xbf16>,
    %207 = vector.extract_strided_slice %156 {offsets = [0, 56], sizes = [8, 8], strides = [1, 1]} : vector<8x96xf32> to vector<8x8xf32>
    %208 = arith.truncf %207 : vector<8x8xf32> to vector<8x8xbf16>
    %c3_111 = arith.constant 3 : index
    %c0_112 = arith.constant 0 : index
    %c0_113 = arith.constant 0 : index
    %209 = vector.load %arg18[%c3_111, %c0_112, %c0_113] : memref<4x8x8xbf16, #tpu.memory_space<vmem>>, vector<1x8x8xbf16>
    %210 = vector.shape_cast %209 : vector<1x8x8xbf16> to vector<8x8xbf16>
    %211 = vector.shape_cast %208 : vector<8x8xbf16> to vector<1x8x8xbf16>
    tpu.vector_store %arg18[%c3_111, %c0_112, %c0_113], %211 {strides = array<i32>} : memref<4x8x8xbf16, #tpu.memory_space<vmem>>, vector<1x8x8xbf16>,
    %212 = vector.extract_strided_slice %156 {offsets = [0, 88], sizes = [8, 8], strides = [1, 1]} : vector<8x96xf32> to vector<8x8xf32>
    %213 = arith.truncf %212 : vector<8x8xf32> to vector<8x8xbf16>
    %c3_114 = arith.constant 3 : index
    %c0_115 = arith.constant 0 : index
    %c0_116 = arith.constant 0 : index
    %214 = vector.load %arg19[%c3_114, %c0_115, %c0_116] : memref<4x8x8xbf16, #tpu.memory_space<vmem>>, vector<1x8x8xbf16>
    %215 = vector.shape_cast %214 : vector<1x8x8xbf16> to vector<8x8xbf16>
    %216 = vector.shape_cast %213 : vector<8x8xbf16> to vector<1x8x8xbf16>
    tpu.vector_store %arg19[%c3_114, %c0_115, %c0_116], %216 {strides = array<i32>} : memref<4x8x8xbf16, #tpu.memory_space<vmem>>, vector<1x8x8xbf16>,
    %c0_117 = arith.constant 0 : index
    %c0_118 = arith.constant 0 : index
    %c0_119 = arith.constant 0 : index
    %217 = vector.load %arg17[%c0_117, %c0_118, %c0_119] : memref<4x8x8xbf16, #tpu.memory_space<vmem>>, vector<4x8x8xbf16>
    %c0_120 = arith.constant 0 : index
    %c0_121 = arith.constant 0 : index
    %c0_122 = arith.constant 0 : index
    %218 = vector.load %arg18[%c0_120, %c0_121, %c0_122] : memref<4x8x8xbf16, #tpu.memory_space<vmem>>, vector<4x8x8xbf16>
    %c0_123 = arith.constant 0 : index
    %c0_124 = arith.constant 0 : index
    %c0_125 = arith.constant 0 : index
    %219 = vector.load %arg19[%c0_123, %c0_124, %c0_125] : memref<4x8x8xbf16, #tpu.memory_space<vmem>>, vector<4x8x8xbf16>
    "tpu.trace_start"() <{level = 10 : i32, message = "bqe,bke->bqk"}> : () -> ()
    %cst_126 = arith.constant dense<0.000000e+00> : vector<4x8x8xf32>
    %220 = tpu.matmul %217, %218, %cst_126 {dimension_numbers = #tpu.dot_dimension_numbers<[2], [2], [1], [1], [0, 0, 0, 1, 1, 1], [0], [0]>} : vector<4x8x8xbf16>, vector<4x8x8xbf16>, vector<4x8x8xf32> -> vector<4x8x8xf32>
    "tpu.trace_stop"() : () -> ()
    %cst_127 = arith.constant dense<0xFF800000> : vector<4x8xf32>
    %221 = vector.multi_reduction <maximumf>, %220, %cst_127 [2] : vector<4x8x8xf32> to vector<4x8xf32>
    %222 = vector.shape_cast %221 : vector<4x8xf32> to vector<4x8x1xf32>
    %223 = vector.broadcast %222 : vector<4x8x1xf32> to vector<4x8x8xf32>
    %224 = arith.subf %220, %223 : vector<4x8x8xf32>
    %225 = math.exp %224 : vector<4x8x8xf32>
    %cst_128 = arith.constant dense<0.000000e+00> : vector<4x8xf32>
    %226 = vector.multi_reduction <add>, %225, %cst_128 [2] : vector<4x8x8xf32> to vector<4x8xf32>
    %227 = vector.shape_cast %226 : vector<4x8xf32> to vector<4x8x1xf32>
    %228 = tpu.reciprocal %227 {approx = true} : vector<4x8x1xf32> -> vector<4x8x1xf32>
    %229 = vector.broadcast %228 : vector<4x8x1xf32> to vector<4x8x8xf32>
    %230 = arith.mulf %225, %229 : vector<4x8x8xf32>
    %231 = arith.truncf %230 : vector<4x8x8xf32> to vector<4x8x8xbf16>
    "tpu.trace_start"() <{level = 10 : i32, message = "bqk,bke->bqe"}> : () -> ()
    %cst_129 = arith.constant dense<0.000000e+00> : vector<4x8x8xf32>
    %232 = tpu.matmul %231, %219, %cst_129 {dimension_numbers = #tpu.dot_dimension_numbers<[2], [1], [1], [2], [0, 0, 0, 1, 1, 2], [0], [0]>} : vector<4x8x8xbf16>, vector<4x8x8xbf16>, vector<4x8x8xf32> -> vector<4x8x8xf32>
    "tpu.trace_stop"() : () -> ()
    %233 = vector.extract_strided_slice %232 {offsets = [0, 0, 0], sizes = [1, 8, 8], strides = [1, 1, 1]} : vector<4x8x8xf32> to vector<1x8x8xf32>
    %234 = vector.shape_cast %233 : vector<1x8x8xf32> to vector<8x8xf32>
    %c0_130 = arith.constant 0 : index
    %c0_131 = arith.constant 0 : index
    %235 = vector.load %arg20[%c0_130, %c0_131] : memref<8x32xf32, #tpu.memory_space<vmem>>, vector<8x8xf32>
    tpu.vector_store %arg20[%c0_130, %c0_131], %234 {strides = array<i32>} : memref<8x32xf32, #tpu.memory_space<vmem>>, vector<8x8xf32>,
    %236 = vector.extract_strided_slice %232 {offsets = [1, 0, 0], sizes = [1, 8, 8], strides = [1, 1, 1]} : vector<4x8x8xf32> to vector<1x8x8xf32>
    %237 = vector.shape_cast %236 : vector<1x8x8xf32> to vector<8x8xf32>
    %c0_132 = arith.constant 0 : index
    %c8_133 = arith.constant 8 : index
    %238 = vector.load %arg20[%c0_132, %c8_133] : memref<8x32xf32, #tpu.memory_space<vmem>>, vector<8x8xf32>
    tpu.vector_store %arg20[%c0_132, %c8_133], %237 {strides = array<i32>} : memref<8x32xf32, #tpu.memory_space<vmem>>, vector<8x8xf32>,
    %239 = vector.extract_strided_slice %232 {offsets = [2, 0, 0], sizes = [1, 8, 8], strides = [1, 1, 1]} : vector<4x8x8xf32> to vector<1x8x8xf32>
    %240 = vector.shape_cast %239 : vector<1x8x8xf32> to vector<8x8xf32>
    %c0_134 = arith.constant 0 : index
    %c16_135 = arith.constant 16 : index
    %241 = vector.load %arg20[%c0_134, %c16_135] : memref<8x32xf32, #tpu.memory_space<vmem>>, vector<8x8xf32>
    tpu.vector_store %arg20[%c0_134, %c16_135], %240 {strides = array<i32>} : memref<8x32xf32, #tpu.memory_space<vmem>>, vector<8x8xf32>,
    %242 = vector.extract_strided_slice %232 {offsets = [3, 0, 0], sizes = [1, 8, 8], strides = [1, 1, 1]} : vector<4x8x8xf32> to vector<1x8x8xf32>
    %243 = vector.shape_cast %242 : vector<1x8x8xf32> to vector<8x8xf32>
    %c0_136 = arith.constant 0 : index
    %c24_137 = arith.constant 24 : index
    %244 = vector.load %arg20[%c0_136, %c24_137] : memref<8x32xf32, #tpu.memory_space<vmem>>, vector<8x8xf32>
    tpu.vector_store %arg20[%c0_136, %c24_137], %243 {strides = array<i32>} : memref<8x32xf32, #tpu.memory_space<vmem>>, vector<8x8xf32>,
    %c0_138 = arith.constant 0 : index
    %c0_139 = arith.constant 0 : index
    %245 = vector.load %arg20[%c0_138, %c0_139] : memref<8x32xf32, #tpu.memory_space<vmem>>, vector<8x32xf32>
    %246 = arith.truncf %245 : vector<8x32xf32> to vector<8x32xbf16>
    %c0_140 = arith.constant 0 : index
    %c0_141 = arith.constant 0 : index
    %247 = vector.load %arg9[%c0_140, %c0_141] : memref<32x32xbf16, #tpu.memory_space<vmem>>, vector<32x32xbf16>
    %cst_142 = arith.constant dense<0.000000e+00> : vector<8x32xf32>
    %248 = tpu.matmul %246, %247, %cst_142 {dimension_numbers = #tpu.dot_dimension_numbers<[1], [0], [0], [1], [0, 0, 1, 1], [], []>} : vector<8x32xbf16>, vector<32x32xbf16>, vector<8x32xf32> -> vector<8x32xf32>
    %c0_143 = arith.constant 0 : index
    %c0_144 = arith.constant 0 : index
    %249 = vector.load %arg10[%c0_143, %c0_144] : memref<1x32xf32, #tpu.memory_space<vmem>>, vector<1x32xf32>
    %250 = vector.broadcast %249 : vector<1x32xf32> to vector<8x32xf32>
    %251 = arith.addf %248, %250 : vector<8x32xf32>
    %cst_145 = arith.constant 1.000000e+00 : f32
    %252 = arith.subf %cst_145, %2 : f32
    %253 = vector.broadcast %252 : f32 to vector<8x32xf32>
    %254 = arith.mulf %253, %251 : vector<8x32xf32>
    %255 = arith.addf %128, %254 : vector<8x32xf32>
    %256 = vector.extract_strided_slice %1 {offsets = [2, 0], sizes = [1, 32], strides = [1, 1]} : vector<4x32xf32> to vector<1x32xf32>
    %257 = vector.extract_strided_slice %1 {offsets = [3, 0], sizes = [1, 32], strides = [1, 1]} : vector<4x32xf32> to vector<1x32xf32>
    %cst_146 = arith.constant dense<0.000000e+00> : vector<8xf32>
    %258 = vector.multi_reduction <add>, %255, %cst_146 [1] : vector<8x32xf32> to vector<8xf32>
    %259 = vector.shape_cast %258 : vector<8xf32> to vector<8x1xf32>
    %cst_147 = arith.constant 3.200000e+01 : f32
    %260 = vector.broadcast %cst_147 : f32 to vector<8x1xf32>
    %261 = arith.divf %259, %260 : vector<8x1xf32>
    %262 = vector.broadcast %261 : vector<8x1xf32> to vector<8x32xf32>
    %263 = arith.subf %255, %262 : vector<8x32xf32>
    %264 = arith.mulf %263, %263 : vector<8x32xf32>
    %cst_148 = arith.constant dense<0.000000e+00> : vector<8xf32>
    %265 = vector.multi_reduction <add>, %264, %cst_148 [1] : vector<8x32xf32> to vector<8xf32>
    %266 = vector.shape_cast %265 : vector<8xf32> to vector<8x1xf32>
    %cst_149 = arith.constant 3.200000e+01 : f32
    %267 = vector.broadcast %cst_149 : f32 to vector<8x1xf32>
    %268 = arith.divf %266, %267 : vector<8x1xf32>
    %cst_150 = arith.constant 9.99999974E-6 : f32
    %269 = vector.broadcast %cst_150 : f32 to vector<8x1xf32>
    %270 = arith.addf %268, %269 : vector<8x1xf32>
    %271 = math.rsqrt %270 : vector<8x1xf32>
    %272 = vector.broadcast %271 : vector<8x1xf32> to vector<8x32xf32>
    %273 = arith.mulf %263, %272 : vector<8x32xf32>
    %274 = vector.broadcast %256 : vector<1x32xf32> to vector<8x32xf32>
    %275 = arith.mulf %273, %274 : vector<8x32xf32>
    %276 = vector.broadcast %257 : vector<1x32xf32> to vector<8x32xf32>
    %277 = arith.addf %275, %276 : vector<8x32xf32>
    %278 = arith.truncf %277 : vector<8x32xf32> to vector<8x32xbf16>
    %c0_151 = arith.constant 0 : index
    %c0_152 = arith.constant 0 : index
    %279 = vector.load %arg12[%c0_151, %c0_152] : memref<32x128xbf16, #tpu.memory_space<vmem>>, vector<32x128xbf16>
    %cst_153 = arith.constant dense<0.000000e+00> : vector<8x128xf32>
    %280 = tpu.matmul %278, %279, %cst_153 {dimension_numbers = #tpu.dot_dimension_numbers<[1], [0], [0], [1], [0, 0, 1, 1], [], []>} : vector<8x32xbf16>, vector<32x128xbf16>, vector<8x128xf32> -> vector<8x128xf32>
    %c0_154 = arith.constant 0 : index
    %c0_155 = arith.constant 0 : index
    %281 = vector.load %arg13[%c0_154, %c0_155] : memref<1x128xf32, #tpu.memory_space<vmem>>, vector<1x128xf32>
    %282 = vector.broadcast %281 : vector<1x128xf32> to vector<8x128xf32>
    %283 = arith.addf %280, %282 : vector<8x128xf32>
    %cst_156 = arith.constant 0.000000e+00 : f32
    %284 = vector.broadcast %cst_156 : f32 to vector<8x128xf32>
    %285 = arith.maximumf %283, %284 : vector<8x128xf32>
    %286 = arith.truncf %285 : vector<8x128xf32> to vector<8x128xbf16>
    %c0_157 = arith.constant 0 : index
    %c0_158 = arith.constant 0 : index
    %287 = vector.load %arg14[%c0_157, %c0_158] : memref<128x32xbf16, #tpu.memory_space<vmem>>, vector<128x32xbf16>
    %cst_159 = arith.constant dense<0.000000e+00> : vector<8x32xf32>
    %288 = tpu.matmul %286, %287, %cst_159 {dimension_numbers = #tpu.dot_dimension_numbers<[1], [0], [0], [1], [0, 0, 1, 1], [], []>} : vector<8x128xbf16>, vector<128x32xbf16>, vector<8x32xf32> -> vector<8x32xf32>
    %c0_160 = arith.constant 0 : index
    %c0_161 = arith.constant 0 : index
    %289 = vector.load %arg15[%c0_160, %c0_161] : memref<1x32xf32, #tpu.memory_space<vmem>>, vector<1x32xf32>
    %290 = vector.broadcast %289 : vector<1x32xf32> to vector<8x32xf32>
    %291 = arith.addf %288, %290 : vector<8x32xf32>
    %292 = arith.addf %255, %291 : vector<8x32xf32>
    %c0_162 = arith.constant 0 : index
    %c0_163 = arith.constant 0 : index
    %293 = vector.load %arg16[%c0_162, %c0_163] : memref<8x32xf32, #tpu.memory_space<vmem>>, vector<8x32xf32>
    tpu.vector_store %arg16[%c0_162, %c0_163], %292 {strides = array<i32>} : memref<8x32xf32, #tpu.memory_space<vmem>>, vector<8x32xf32>,
    return
  }
  func.func @transform_0(%arg0: i32) -> (i32, i32) {
    %c0_i32 = arith.constant 0 : i32
    %c0_i32_0 = arith.constant 0 : i32
    return %arg0, %c0_i32 : i32, i32
  }
  func.func @transform_1(%arg0: i32) -> (i32, i32) {
    %c0_i32 = arith.constant 0 : i32
    %c0_i32_0 = arith.constant 0 : i32
    %c0_i32_1 = arith.constant 0 : i32
    return %c0_i32, %c0_i32_0 : i32, i32
  }
  func.func @transform_2(%arg0: i32) -> (i32, i32) {
    %c0_i32 = arith.constant 0 : i32
    %c0_i32_0 = arith.constant 0 : i32
    %c0_i32_1 = arith.constant 0 : i32
    return %c0_i32, %c0_i32_0 : i32, i32
  }
  func.func @transform_3(%arg0: i32) -> (i32, i32) {
    %c0_i32 = arith.constant 0 : i32
    %c0_i32_0 = arith.constant 0 : i32
    %c0_i32_1 = arith.constant 0 : i32
    return %c0_i32, %c0_i32_0 : i32, i32
  }
  func.func @transform_4(%arg0: i32) -> (i32, i32) {
    %c0_i32 = arith.constant 0 : i32
    %c0_i32_0 = arith.constant 0 : i32
    %c0_i32_1 = arith.constant 0 : i32
    return %c0_i32, %c0_i32_0 : i32, i32
  }
  func.func @transform_5(%arg0: i32) -> (i32, i32) {
    %c0_i32 = arith.constant 0 : i32
    %c0_i32_0 = arith.constant 0 : i32
    %c0_i32_1 = arith.constant 0 : i32
    return %c0_i32, %c0_i32_0 : i32, i32
  }
  func.func @transform_6(%arg0: i32) -> (i32, i32) {
    %c0_i32 = arith.constant 0 : i32
    %c0_i32_0 = arith.constant 0 : i32
    %c0_i32_1 = arith.constant 0 : i32
    return %c0_i32, %c0_i32_0 : i32, i32
  }
  func.func @transform_7(%arg0: i32) -> (i32, i32) {
    %c0_i32 = arith.constant 0 : i32
    %c0_i32_0 = arith.constant 0 : i32
    %c0_i32_1 = arith.constant 0 : i32
    return %c0_i32, %c0_i32_0 : i32, i32
  }
  func.func @transform_8(%arg0: i32) -> (i32, i32) {
    %c0_i32 = arith.constant 0 : i32
    %c0_i32_0 = arith.constant 0 : i32
    %c0_i32_1 = arith.constant 0 : i32
    return %c0_i32, %c0_i32_0 : i32, i32
  }
  func.func @transform_9(%arg0: i32) -> (i32, i32) {
    %c0_i32 = arith.constant 0 : i32
    %c0_i32_0 = arith.constant 0 : i32
    %c0_i32_1 = arith.constant 0 : i32
    return %c0_i32, %c0_i32_0 : i32, i32
  }
  func.func @transform_10(%arg0: i32) -> i32 {
    %c0_i32 = arith.constant 0 : i32
    %c0_i32_0 = arith.constant 0 : i32
    return %c0_i32 : i32
  }
  func.func @transform_11(%arg0: i32) -> (i32, i32) {
    %c0_i32 = arith.constant 0 : i32
    %c0_i32_0 = arith.constant 0 : i32
    %c0_i32_1 = arith.constant 0 : i32
    return %c0_i32, %c0_i32_0 : i32, i32
  }
  func.func @transform_12(%arg0: i32) -> (i32, i32) {
    %c0_i32 = arith.constant 0 : i32
    %c0_i32_0 = arith.constant 0 : i32
    %c0_i32_1 = arith.constant 0 : i32
    return %c0_i32, %c0_i32_0 : i32, i32
  }
  func.func @transform_13(%arg0: i32) -> (i32, i32) {
    %c0_i32 = arith.constant 0 : i32
    %c0_i32_0 = arith.constant 0 : i32
    %c0_i32_1 = arith.constant 0 : i32
    return %c0_i32, %c0_i32_0 : i32, i32
  }
  func.func @transform_14(%arg0: i32) -> (i32, i32) {
    %c0_i32 = arith.constant 0 : i32
    %c0_i32_0 = arith.constant 0 : i32
    %c0_i32_1 = arith.constant 0 : i32
    return %c0_i32, %c0_i32_0 : i32, i32
  }
  func.func @transform_15(%arg0: i32) -> (i32, i32) {
    %c0_i32 = arith.constant 0 : i32
    %c0_i32_0 = arith.constant 0 : i32
    return %arg0, %c0_i32 : i32, i32
  }
}

</mosaic_0001>

<llo_original>
// kernel: tpu_custom_call.1
$region0: #{tpu_custom_call.1}
  #allocation0 [shape = 'u32[]', space=smem, size = 0x4, offset = 0x4, fixed_abs, tag = 'smem constant byte address 0x4 - core index']
  #allocation1 [shape = 'u32[144,128]{1,0:T(1,128)}', space=vmem, size = 0x12000, scoped, tag = 'internal scratch']
  #allocation2 [shape = 'bf16[4,8,8]{2,1,0:T(8,128)(2,1)}', space=vmem, size = 0x2000, scoped, tag = 'scratch operand']
  #allocation3 [shape = 'bf16[4,8,8]{2,1,0:T(8,128)(2,1)}', space=vmem, size = 0x2000, scoped, tag = 'scratch operand']
  #allocation4 [shape = 'bf16[4,8,8]{2,1,0:T(8,128)(2,1)}', space=vmem, size = 0x2000, scoped, tag = 'scratch operand']
  #allocation5 [shape = 'f32[8,32]{1,0:T(8,128)}', space=vmem, size = 0x1000, scoped, tag = 'scratch operand']
  #allocation6 [shape = 'f32[1]{0:T(128)S(6)}', space=smem, size = 0x200, scoped, tag = 'scoped memory for tpu_custom_call.1']
  %s0 = inlined_call_operand.vmem [shape: f32[16,32], index: 0, kind: input, shape index: {}]
  %s1 = inlined_call_operand.hbm [shape: f32[4,32], index: 1, kind: input, shape index: {}]
  %s2 = inlined_call_operand.vmem [shape: bf16[32,96], index: 2, kind: input, shape index: {}]
  %s3 = inlined_call_operand.vmem [shape: f32[1,96], index: 3, kind: input, shape index: {}]
  %s4 = inlined_call_operand.vmem [shape: bf16[32,32], index: 4, kind: input, shape index: {}]
  %s5 = inlined_call_operand.vmem [shape: f32[1,32], index: 5, kind: input, shape index: {}]
  %s6 = inlined_call_operand.vmem [shape: bf16[32,96], index: 6, kind: input, shape index: {}]
  %s7 = inlined_call_operand.hbm [shape: f32[1,96], index: 7, kind: input, shape index: {}]
  %s8 = inlined_call_operand.vmem [shape: bf16[32,32], index: 8, kind: input, shape index: {}]
  %s9 = inlined_call_operand.vmem [shape: f32[1,32], index: 9, kind: input, shape index: {}]
  %s10 = inlined_call_operand.<no memory space> [shape: f32[1], index: 10, kind: input, shape index: {}]
  %s11 = inlined_call_operand.vmem [shape: bf16[32,128], index: 11, kind: input, shape index: {}]
  %s12 = inlined_call_operand.vmem [shape: f32[1,128], index: 12, kind: input, shape index: {}]
  %s13 = inlined_call_operand.vmem [shape: bf16[128,32], index: 13, kind: input, shape index: {}]
  %s14 = inlined_call_operand.vmem [shape: f32[1,32], index: 14, kind: input, shape index: {}]
  %s15 = inlined_call_operand.hbm [shape: f32[16,32], index: 15, kind: output, shape index: {}]
  %s16 = sld [smem:[#allocation0]]
  $region101: #{tpu_custom_call.1} parent=0
    _
  %s18 = ssub.s32 1, %s16
  %s19 = scalar_select 0, %s18, %s16
  %20 = sst [smem:[#allocation6]] %s10
  $region1: #{tpu_custom_call.1} parent=0
    #allocation7 [shape = 'u8[2048]{0}', space=vmem, size = 0x800, scoped, tag = 'input window, operand 1, single buffered']
    #allocation8 [shape = 's32[2]{0}', space=sflag, size = 0x8, scoped, tag = 'scoped memory for tpu_custom_call.1']
    #allocation9 [shape = 's32[2]{0}', space=sflag, size = 0x8, scoped, tag = 'scoped memory for tpu_custom_call.1']
    #allocation10 [shape = 'u8[512]{0}', space=vmem, size = 0x400, scoped, tag = 'input window, operand 7, single buffered']
    #allocation11 [shape = 's32[1]{0}', space=sflag, size = 0x4, scoped, tag = 'scoped memory for tpu_custom_call.1']
    #allocation12 [shape = 'u8[8192]{0}', space=vmem, size = 0x2000, scoped, tag = 'output window, operand 0']
    %21 = vsyncpa [#allocation8], 0
    %22 = vsyncpa [#allocation11], 0
    %23 = vsyncpa [#allocation9], 0
    %s24 = scalar_lea.sflag [#allocation9], 1
    %25 = vsyncpa %s24, 0
    loop: start=0, step=1, limit=4
    $region2: #{tpu_custom_call.1} parent=1 // loop_pre_header
      _
    $region3: #{tpu_custom_call.1} parent=1 // loop_header
      %s27 = sphi 0, %s31
      %p28 = scmp.ge.s32.totalorder %s27, 4
      %s37 = sphi 0, %s39
      %s40 = sphi 0, %s37
      %s41 = sphi 0, %s40
      %s57 = sphi 0, %s41
      %s61 = sphi 0, %s61
      %s63 = sphi 0, %s61
      %s64 = sphi 0, %s63
      %s78 = sphi 0, %s64
      %s82 = sphi 0, %s82
      %s84 = sphi 0, %s82
      %s85 = sphi 0, %s84
      %s99 = sphi 0, %s85
      %s103 = sphi 0, %s103
      %s105 = sphi 0, %s103
      %s106 = sphi 0, %s105
      %s120 = sphi 0, %s106
      %s124 = sphi 0, %s124
      %s126 = sphi 0, %s124
      %s127 = sphi 0, %s126
      %s141 = sphi 0, %s127
      %s145 = sphi 0, %s145
      %s147 = sphi 0, %s145
      %s148 = sphi 0, %s147
      %s162 = sphi 0, %s148
      %s166 = sphi 0, %s166
      %s168 = sphi 0, %s166
      %s169 = sphi 0, %s168
      %s183 = sphi 0, %s169
      %s187 = sphi 0, %s187
      %s189 = sphi 0, %s187
      %s190 = sphi 0, %s189
      %s204 = sphi 0, %s190
      %s208 = sphi 0, %s208
      %s210 = sphi 0, %s208
      %s211 = sphi 0, %s210
      %s225 = sphi 0, %s211
      %s229 = sphi 0, %s229
      %s231 = sphi 0, %s229
      %s232 = sphi 0, %s231
      %s246 = sphi 0, %s232
      %s250 = sphi 0, %s250
      %s252 = sphi 0, %s250
      %s253 = sphi 0, %s252
      %s267 = sphi 0, %s253
      %s271 = sphi 0, %s271
      %s273 = sphi 0, %s271
      %s274 = sphi 0, %s273
      %s288 = sphi 0, %s274
      %s292 = sphi 0, %s292
      %s294 = sphi 0, %s292
      %s295 = sphi 0, %s294
      %s309 = sphi 0, %s295
      %s313 = sphi 0, %s313
      %s315 = sphi 0, %s313
      %s316 = sphi 0, %s315
      %s330 = sphi 0, %s316
      %s334 = sphi 0, %s334
      %s336 = sphi 0, %s334
      %s337 = sphi 0, %s336
      %s351 = sphi 0, %s337
      %s357 = sphi 0, %s359
      %s360 = sphi 0, %s357
      %s361 = sphi 0, %s360
      %s377 = sphi 0, %s361
    $region4: #{tpu_custom_call.1} parent=1 // loop_header_branch
      %30 = sbr.rel (%p28) target = $region8
    $region5: #{tpu_custom_call.1} parent=1 // loop_body
      %s32 = ssub.s32 %s27, 1
      %s33 = ssub.s32 %s27, 2
      %s34 = sadd.s32 %s27, 1
      %s35 = ssub.s32 %s27, %s34
      %p36 = scmp.eq.s32.totalorder %s35, 0
      %s38 = sadd.s32 %s37, 1
      %s39 = scalar_select %p36, %s37, %s38
      %p42 = pneg %p36
      %p43 = scmp.eq.s32.totalorder %s27, 1
      %p44 = por %p42, %p43
      %p45 = scmp.ne.s32.totalorder %s37, %s40
      %p46 = scmp.eq.s32.totalorder %s27, 0
      %p47 = por %p45, %p46
      %p48 = scmp.ne.s32.totalorder %s37, %s40
      %p49 = scmp.eq.s32.totalorder %s32, 1
      %p50 = por %p48, %p49
      %p51 = scmp.ne.s32.totalorder %s40, %s41
      %p52 = scmp.eq.s32.totalorder %s32, 0
      %p53 = por %p51, %p52
      %p54 = scmp.ne.s32.totalorder %s40, %s41
      %p55 = scmp.eq.s32.totalorder %s33, 1
      %p56 = por %p54, %p55
      %p58 = scmp.ne.s32.totalorder %s41, %s57
      %p59 = scmp.eq.s32.totalorder %s33, 0
      %p60 = por %p58, %p59
      %s62 = sadd.s32 %s61, 1
      %p65 = scmp.eq.s32.totalorder %s27, 1
      %p66 = scmp.ne.s32.totalorder %s61, %s63
      %p67 = scmp.eq.s32.totalorder %s27, 0
      %p68 = por %p66, %p67
      %p69 = scmp.ne.s32.totalorder %s61, %s63
      %p70 = scmp.eq.s32.totalorder %s32, 1
      %p71 = por %p69, %p70
      %p72 = scmp.ne.s32.totalorder %s63, %s64
      %p73 = scmp.eq.s32.totalorder %s32, 0
      %p74 = por %p72, %p73
      %p75 = scmp.ne.s32.totalorder %s63, %s64
      %p76 = scmp.eq.s32.totalorder %s33, 1
      %p77 = por %p75, %p76
      %p79 = scmp.ne.s32.totalorder %s64, %s78
      %p80 = scmp.eq.s32.totalorder %s33, 0
      %p81 = por %p79, %p80
      %s83 = sadd.s32 %s82, 1
      %p86 = scmp.eq.s32.totalorder %s27, 1
      %p87 = scmp.ne.s32.totalorder %s82, %s84
      %p88 = scmp.eq.s32.totalorder %s27, 0
      %p89 = por %p87, %p88
      %p90 = scmp.ne.s32.totalorder %s82, %s84
      %p91 = scmp.eq.s32.totalorder %s32, 1
      %p92 = por %p90, %p91
      %p93 = scmp.ne.s32.totalorder %s84, %s85
      %p94 = scmp.eq.s32.totalorder %s32, 0
      %p95 = por %p93, %p94
      %p96 = scmp.ne.s32.totalorder %s84, %s85
      %p97 = scmp.eq.s32.totalorder %s33, 1
      %p98 = por %p96, %p97
      %p100 = scmp.ne.s32.totalorder %s85, %s99
      %p101 = scmp.eq.s32.totalorder %s33, 0
      %p102 = por %p100, %p101
      %s104 = sadd.s32 %s103, 1
      %p107 = scmp.eq.s32.totalorder %s27, 1
      %p108 = scmp.ne.s32.totalorder %s103, %s105
      %p109 = scmp.eq.s32.totalorder %s27, 0
      %p110 = por %p108, %p109
      %p111 = scmp.ne.s32.totalorder %s103, %s105
      %p112 = scmp.eq.s32.totalorder %s32, 1
      %p113 = por %p111, %p112
      %p114 = scmp.ne.s32.totalorder %s105, %s106
      %p115 = scmp.eq.s32.totalorder %s32, 0
      %p116 = por %p114, %p115
      %p117 = scmp.ne.s32.totalorder %s105, %s106
      %p118 = scmp.eq.s32.totalorder %s33, 1
      %p119 = por %p117, %p118
      %p121 = scmp.ne.s32.totalorder %s106, %s120
      %p122 = scmp.eq.s32.totalorder %s33, 0
      %p123 = por %p121, %p122
      %s125 = sadd.s32 %s124, 1
      %p128 = scmp.eq.s32.totalorder %s27, 1
      %p129 = scmp.ne.s32.totalorder %s124, %s126
      %p130 = scmp.eq.s32.totalorder %s27, 0
      %p131 = por %p129, %p130
      %p132 = scmp.ne.s32.totalorder %s124, %s126
      %p133 = scmp.eq.s32.totalorder %s32, 1
      %p134 = por %p132, %p133
      %p135 = scmp.ne.s32.totalorder %s126, %s127
      %p136 = scmp.eq.s32.totalorder %s32, 0
      %p137 = por %p135, %p136
      %p138 = scmp.ne.s32.totalorder %s126, %s127
      %p139 = scmp.eq.s32.totalorder %s33, 1
      %p140 = por %p138, %p139
      %p142 = scmp.ne.s32.totalorder %s127, %s141
      %p143 = scmp.eq.s32.totalorder %s33, 0
      %p144 = por %p142, %p143
      %s146 = sadd.s32 %s145, 1
      %p149 = scmp.eq.s32.totalorder %s27, 1
      %p150 = scmp.ne.s32.totalorder %s145, %s147
      %p151 = scmp.eq.s32.totalorder %s27, 0
      %p152 = por %p150, %p151
      %p153 = scmp.ne.s32.totalorder %s145, %s147
      %p154 = scmp.eq.s32.totalorder %s32, 1
      %p155 = por %p153, %p154
      %p156 = scmp.ne.s32.totalorder %s147, %s148
      %p157 = scmp.eq.s32.totalorder %s32, 0
      %p158 = por %p156, %p157
      %p159 = scmp.ne.s32.totalorder %s147, %s148
      %p160 = scmp.eq.s32.totalorder %s33, 1
      %p161 = por %p159, %p160
      %p163 = scmp.ne.s32.totalorder %s148, %s162
      %p164 = scmp.eq.s32.totalorder %s33, 0
      %p165 = por %p163, %p164
      %s167 = sadd.s32 %s166, 1
      %p170 = scmp.eq.s32.totalorder %s27, 1
      %p171 = scmp.ne.s32.totalorder %s166, %s168
      %p172 = scmp.eq.s32.totalorder %s27, 0
      %p173 = por %p171, %p172
      %p174 = scmp.ne.s32.totalorder %s166, %s168
      %p175 = scmp.eq.s32.totalorder %s32, 1
      %p176 = por %p174, %p175
      %p177 = scmp.ne.s32.totalorder %s168, %s169
      %p178 = scmp.eq.s32.totalorder %s32, 0
      %p179 = por %p177, %p178
      %p180 = scmp.ne.s32.totalorder %s168, %s169
      %p181 = scmp.eq.s32.totalorder %s33, 1
      %p182 = por %p180, %p181
      %p184 = scmp.ne.s32.totalorder %s169, %s183
      %p185 = scmp.eq.s32.totalorder %s33, 0
      %p186 = por %p184, %p185
      %s188 = sadd.s32 %s187, 1
      %p191 = scmp.eq.s32.totalorder %s27, 1
      %p192 = scmp.ne.s32.totalorder %s187, %s189
      %p193 = scmp.eq.s32.totalorder %s27, 0
      %p194 = por %p192, %p193
      %p195 = scmp.ne.s32.totalorder %s187, %s189
      %p196 = scmp.eq.s32.totalorder %s32, 1
      %p197 = por %p195, %p196
      %p198 = scmp.ne.s32.totalorder %s189, %s190
      %p199 = scmp.eq.s32.totalorder %s32, 0
      %p200 = por %p198, %p199
      %p201 = scmp.ne.s32.totalorder %s189, %s190
      %p202 = scmp.eq.s32.totalorder %s33, 1
      %p203 = por %p201, %p202
      %p205 = scmp.ne.s32.totalorder %s190, %s204
      %p206 = scmp.eq.s32.totalorder %s33, 0
      %p207 = por %p205, %p206
      %s209 = sadd.s32 %s208, 1
      %p212 = scmp.eq.s32.totalorder %s27, 1
      %p213 = scmp.ne.s32.totalorder %s208, %s210
      %p214 = scmp.eq.s32.totalorder %s27, 0
      %p215 = por %p213, %p214
      %p216 = scmp.ne.s32.totalorder %s208, %s210
      %p217 = scmp.eq.s32.totalorder %s32, 1
      %p218 = por %p216, %p217
      %p219 = scmp.ne.s32.totalorder %s210, %s211
      %p220 = scmp.eq.s32.totalorder %s32, 0
      %p221 = por %p219, %p220
      %p222 = scmp.ne.s32.totalorder %s210, %s211
      %p223 = scmp.eq.s32.totalorder %s33, 1
      %p224 = por %p222, %p223
      %p226 = scmp.ne.s32.totalorder %s211, %s225
      %p227 = scmp.eq.s32.totalorder %s33, 0
      %p228 = por %p226, %p227
      %s230 = sadd.s32 %s229, 1
      %p233 = scmp.eq.s32.totalorder %s27, 1
      %p234 = scmp.ne.s32.totalorder %s229, %s231
      %p235 = scmp.eq.s32.totalorder %s27, 0
      %p236 = por %p234, %p235
      %p237 = scmp.ne.s32.totalorder %s229, %s231
      %p238 = scmp.eq.s32.totalorder %s32, 1
      %p239 = por %p237, %p238
      %p240 = scmp.ne.s32.totalorder %s231, %s232
      %p241 = scmp.eq.s32.totalorder %s32, 0
      %p242 = por %p240, %p241
      %p243 = scmp.ne.s32.totalorder %s231, %s232
      %p244 = scmp.eq.s32.totalorder %s33, 1
      %p245 = por %p243, %p244
      %p247 = scmp.ne.s32.totalorder %s232, %s246
      %p248 = scmp.eq.s32.totalorder %s33, 0
      %p249 = por %p247, %p248
      %s251 = sadd.s32 %s250, 1
      %p254 = scmp.eq.s32.totalorder %s27, 1
      %p255 = scmp.ne.s32.totalorder %s250, %s252
      %p256 = scmp.eq.s32.totalorder %s27, 0
      %p257 = por %p255, %p256
      %p258 = scmp.ne.s32.totalorder %s250, %s252
      %p259 = scmp.eq.s32.totalorder %s32, 1
      %p260 = por %p258, %p259
      %p261 = scmp.ne.s32.totalorder %s252, %s253
      %p262 = scmp.eq.s32.totalorder %s32, 0
      %p263 = por %p261, %p262
      %p264 = scmp.ne.s32.totalorder %s252, %s253
      %p265 = scmp.eq.s32.totalorder %s33, 1
      %p266 = por %p264, %p265
      %p268 = scmp.ne.s32.totalorder %s253, %s267
      %p269 = scmp.eq.s32.totalorder %s33, 0
      %p270 = por %p268, %p269
      %s272 = sadd.s32 %s271, 1
      %p275 = scmp.eq.s32.totalorder %s27, 1
      %p276 = scmp.ne.s32.totalorder %s271, %s273
      %p277 = scmp.eq.s32.totalorder %s27, 0
      %p278 = por %p276, %p277
      %p279 = scmp.ne.s32.totalorder %s271, %s273
      %p280 = scmp.eq.s32.totalorder %s32, 1
      %p281 = por %p279, %p280
      %p282 = scmp.ne.s32.totalorder %s273, %s274
      %p283 = scmp.eq.s32.totalorder %s32, 0
      %p284 = por %p282, %p283
      %p285 = scmp.ne.s32.totalorder %s273, %s274
      %p286 = scmp.eq.s32.totalorder %s33, 1
      %p287 = por %p285, %p286
      %p289 = scmp.ne.s32.totalorder %s274, %s288
      %p290 = scmp.eq.s32.totalorder %s33, 0
      %p291 = por %p289, %p290
      %s293 = sadd.s32 %s292, 1
      %p296 = scmp.eq.s32.totalorder %s27, 1
      %p297 = scmp.ne.s32.totalorder %s292, %s294
      %p298 = scmp.eq.s32.totalorder %s27, 0
      %p299 = por %p297, %p298
      %p300 = scmp.ne.s32.totalorder %s292, %s294
      %p301 = scmp.eq.s32.totalorder %s32, 1
      %p302 = por %p300, %p301
      %p303 = scmp.ne.s32.totalorder %s294, %s295
      %p304 = scmp.eq.s32.totalorder %s32, 0
      %p305 = por %p303, %p304
      %p306 = scmp.ne.s32.totalorder %s294, %s295
      %p307 = scmp.eq.s32.totalorder %s33, 1
      %p308 = por %p306, %p307
      %p310 = scmp.ne.s32.totalorder %s295, %s309
      %p311 = scmp.eq.s32.totalorder %s33, 0
      %p312 = por %p310, %p311
      %s314 = sadd.s32 %s313, 1
      %p317 = scmp.eq.s32.totalorder %s27, 1
      %p318 = scmp.ne.s32.totalorder %s313, %s315
      %p319 = scmp.eq.s32.totalorder %s27, 0
      %p320 = por %p318, %p319
      %p321 = scmp.ne.s32.totalorder %s313, %s315
      %p322 = scmp.eq.s32.totalorder %s32, 1
      %p323 = por %p321, %p322
      %p324 = scmp.ne.s32.totalorder %s315, %s316
      %p325 = scmp.eq.s32.totalorder %s32, 0
      %p326 = por %p324, %p325
      %p327 = scmp.ne.s32.totalorder %s315, %s316
      %p328 = scmp.eq.s32.totalorder %s33, 1
      %p329 = por %p327, %p328
      %p331 = scmp.ne.s32.totalorder %s316, %s330
      %p332 = scmp.eq.s32.totalorder %s33, 0
      %p333 = por %p331, %p332
      %s335 = sadd.s32 %s334, 1
      %p338 = scmp.eq.s32.totalorder %s27, 1
      %p339 = scmp.ne.s32.totalorder %s334, %s336
      %p340 = scmp.eq.s32.totalorder %s27, 0
      %p341 = por %p339, %p340
      %p342 = scmp.ne.s32.totalorder %s334, %s336
      %p343 = scmp.eq.s32.totalorder %s32, 1
      %p344 = por %p342, %p343
      %p345 = scmp.ne.s32.totalorder %s336, %s337
      %p346 = scmp.eq.s32.totalorder %s32, 0
      %p347 = por %p345, %p346
      %p348 = scmp.ne.s32.totalorder %s336, %s337
      %p349 = scmp.eq.s32.totalorder %s33, 1
      %p350 = por %p348, %p349
      %p352 = scmp.ne.s32.totalorder %s337, %s351
      %p353 = scmp.eq.s32.totalorder %s33, 0
      %p354 = por %p352, %p353
      %s355 = ssub.s32 %s27, %s34
      %p356 = scmp.eq.s32.totalorder %s355, 0
      %s358 = sadd.s32 %s357, 1
      %s359 = scalar_select %p356, %s357, %s358
      %p362 = pneg %p356
      %p363 = scmp.eq.s32.totalorder %s27, 1
      %p364 = por %p362, %p363
      %p365 = scmp.ne.s32.totalorder %s357, %s360
      %p366 = scmp.eq.s32.totalorder %s27, 0
      %p367 = por %p365, %p366
      %p368 = scmp.ne.s32.totalorder %s357, %s360
      %p369 = scmp.eq.s32.totalorder %s32, 1
      %p370 = por %p368, %p369
      %p371 = scmp.ne.s32.totalorder %s360, %s361
      %p372 = scmp.eq.s32.totalorder %s32, 0
      %p373 = por %p371, %p372
      %p374 = scmp.ne.s32.totalorder %s360, %s361
      %p375 = scmp.eq.s32.totalorder %s33, 1
      %p376 = por %p374, %p375
      %p378 = scmp.ne.s32.totalorder %s361, %s377
      %p379 = scmp.eq.s32.totalorder %s33, 0
      %p380 = por %p378, %p379
      %p381 = scmp.le.s32.totalorder 1, %s27
      %p382 = scmp.lt.s32.totalorder %s27, 3
      %p383 = pnand %p381, %p382
      %p384 = pneg %p383
      // Predicated region
      $region9: #{tpu_custom_call.1} parent=5 // pred_check
        _
      $region10: #{tpu_custom_call.1} parent=5 // pred_check_branch
        %386 = sbr.rel (%p383) target = $region12
      $region11: #{tpu_custom_call.1} parent=5 // pred_region
        %s387 = ssub.s32 %s27, 1
        // Predicated region
        $region13: #{tpu_custom_call.1} parent=11 // pred_check
          %p388 = pneg %p74
        $region14: #{tpu_custom_call.1} parent=11 // pred_check_branch
          %390 = sbr.rel (%p388) target = $region16
        $region15: #{tpu_custom_call.1} parent=11 // pred_region
          %s392 = ssub.s32 64, 64
          %393 = vsyncadd [#allocation8], %s392
          %s395 = sshll.u32 [#allocation7], 4
          %s396 = int_to_ptr.vmem [resolvable:$true] %s395
          %398 = dma.hbm_to_vmem [thread:$0]  %s1, 64, %s396, [#allocation8]
        $region16: #{tpu_custom_call.1} parent=11 // pred_fallthru
          _
        // Predicated region
        $region17: #{tpu_custom_call.1} parent=11 // pred_check
          %p399 = pneg %p95
        $region18: #{tpu_custom_call.1} parent=11 // pred_check_branch
          %401 = sbr.rel (%p399) target = $region20
        $region19: #{tpu_custom_call.1} parent=11 // pred_region
          _
        $region20: #{tpu_custom_call.1} parent=11 // pred_fallthru
          _
        // Predicated region
        $region21: #{tpu_custom_call.1} parent=11 // pred_check
          %p402 = pneg %p116
        $region22: #{tpu_custom_call.1} parent=11 // pred_check_branch
          %404 = sbr.rel (%p402) target = $region24
        $region23: #{tpu_custom_call.1} parent=11 // pred_region
          _
        $region24: #{tpu_custom_call.1} parent=11 // pred_fallthru
          _
        // Predicated region
        $region25: #{tpu_custom_call.1} parent=11 // pred_check
          %p405 = pneg %p137
        $region26: #{tpu_custom_call.1} parent=11 // pred_check_branch
          %407 = sbr.rel (%p405) target = $region28
        $region27: #{tpu_custom_call.1} parent=11 // pred_region
          _
        $region28: #{tpu_custom_call.1} parent=11 // pred_fallthru
          _
        // Predicated region
        $region29: #{tpu_custom_call.1} parent=11 // pred_check
          %p408 = pneg %p158
        $region30: #{tpu_custom_call.1} parent=11 // pred_check_branch
          %410 = sbr.rel (%p408) target = $region32
        $region31: #{tpu_custom_call.1} parent=11 // pred_region
          _
        $region32: #{tpu_custom_call.1} parent=11 // pred_fallthru
          _
        // Predicated region
        $region33: #{tpu_custom_call.1} parent=11 // pred_check
          %p411 = pneg %p179
        $region34: #{tpu_custom_call.1} parent=11 // pred_check_branch
          %413 = sbr.rel (%p411) target = $region36
        $region35: #{tpu_custom_call.1} parent=11 // pred_region
          _
        $region36: #{tpu_custom_call.1} parent=11 // pred_fallthru
          _
        // Predicated region
        $region37: #{tpu_custom_call.1} parent=11 // pred_check
          %p414 = pneg %p200
        $region38: #{tpu_custom_call.1} parent=11 // pred_check_branch
          %416 = sbr.rel (%p414) target = $region40
        $region39: #{tpu_custom_call.1} parent=11 // pred_region
          %s418 = ssub.s32 16, 16
          %419 = vsyncadd [#allocation11], %s418
          %s421 = sshll.u32 [#allocation10], 4
          %s422 = int_to_ptr.vmem [resolvable:$true] %s421
          %424 = dma.hbm_to_vmem [thread:$0]  %s7, 16, %s422, [#allocation11]
        $region40: #{tpu_custom_call.1} parent=11 // pred_fallthru
          _
        // Predicated region
        $region41: #{tpu_custom_call.1} parent=11 // pred_check
          %p425 = pneg %p221
        $region42: #{tpu_custom_call.1} parent=11 // pred_check_branch
          %427 = sbr.rel (%p425) target = $region44
        $region43: #{tpu_custom_call.1} parent=11 // pred_region
          _
        $region44: #{tpu_custom_call.1} parent=11 // pred_fallthru
          _
        // Predicated region
        $region45: #{tpu_custom_call.1} parent=11 // pred_check
          %p428 = pneg %p242
        $region46: #{tpu_custom_call.1} parent=11 // pred_check_branch
          %430 = sbr.rel (%p428) target = $region48
        $region47: #{tpu_custom_call.1} parent=11 // pred_region
          _
        $region48: #{tpu_custom_call.1} parent=11 // pred_fallthru
          _
        // Predicated region
        $region49: #{tpu_custom_call.1} parent=11 // pred_check
          %p431 = pneg %p263
        $region50: #{tpu_custom_call.1} parent=11 // pred_check_branch
          %433 = sbr.rel (%p431) target = $region52
        $region51: #{tpu_custom_call.1} parent=11 // pred_region
          _
        $region52: #{tpu_custom_call.1} parent=11 // pred_fallthru
          _
        // Predicated region
        $region53: #{tpu_custom_call.1} parent=11 // pred_check
          %p434 = pneg %p284
        $region54: #{tpu_custom_call.1} parent=11 // pred_check_branch
          %436 = sbr.rel (%p434) target = $region56
        $region55: #{tpu_custom_call.1} parent=11 // pred_region
          _
        $region56: #{tpu_custom_call.1} parent=11 // pred_fallthru
          _
        // Predicated region
        $region57: #{tpu_custom_call.1} parent=11 // pred_check
          %p437 = pneg %p305
        $region58: #{tpu_custom_call.1} parent=11 // pred_check_branch
          %439 = sbr.rel (%p437) target = $region60
        $region59: #{tpu_custom_call.1} parent=11 // pred_region
          _
        $region60: #{tpu_custom_call.1} parent=11 // pred_fallthru
          _
        // Predicated region
        $region61: #{tpu_custom_call.1} parent=11 // pred_check
          %p440 = pneg %p326
        $region62: #{tpu_custom_call.1} parent=11 // pred_check_branch
          %442 = sbr.rel (%p440) target = $region64
        $region63: #{tpu_custom_call.1} parent=11 // pred_region
          _
        $region64: #{tpu_custom_call.1} parent=11 // pred_fallthru
          _
        // Predicated region
        $region65: #{tpu_custom_call.1} parent=11 // pred_check
          %p443 = pneg %p347
        $region66: #{tpu_custom_call.1} parent=11 // pred_check_branch
          %445 = sbr.rel (%p443) target = $region68
        $region67: #{tpu_custom_call.1} parent=11 // pred_region
          _
        $region68: #{tpu_custom_call.1} parent=11 // pred_fallthru
          _
      $region12: #{tpu_custom_call.1} parent=5 // pred_fallthru
        _
      %p446 = scmp.lt.s32.totalorder %s27, 2
      // Predicated region
      $region69: #{tpu_custom_call.1} parent=5 // pred_check
        %p447 = pneg %p446
      $region70: #{tpu_custom_call.1} parent=5 // pred_check_branch
        %449 = sbr.rel (%p447) target = $region72
      $region71: #{tpu_custom_call.1} parent=5 // pred_region
        // Predicated region
        $region73: #{tpu_custom_call.1} parent=71 // pred_check
          %p450 = pneg %p47
        $region74: #{tpu_custom_call.1} parent=71 // pred_check_branch
          %452 = sbr.rel (%p450) target = $region76
        $region75: #{tpu_custom_call.1} parent=71 // pred_region
          %p453 = scmp.lt.s32.totalorder %s27, 1
          %s454 = scalar_select %p453, %s27, 1
          %s455 = smul.addr %s454, 8
          %s456 = scalar_lea.vmem %s0, %s455
        $region76: #{tpu_custom_call.1} parent=71 // pred_fallthru
          _
      $region72: #{tpu_custom_call.1} parent=5 // pred_fallthru
        _
      %p457 = scmp.le.s32.totalorder 1, %s27
      %p458 = scmp.lt.s32.totalorder %s27, 3
      %p459 = pnand %p457, %p458
      %p460 = pneg %p459
      // Predicated region
      $region77: #{tpu_custom_call.1} parent=5 // pred_check
        _
      $region78: #{tpu_custom_call.1} parent=5 // pred_check_branch
        %462 = sbr.rel (%p459) target = $region80
      $region79: #{tpu_custom_call.1} parent=5 // pred_region
        %s463 = ssub.s32 %s27, 1
        // Predicated region
        $region81: #{tpu_custom_call.1} parent=79 // pred_check
          %p464 = pneg %p74
        $region82: #{tpu_custom_call.1} parent=79 // pred_check_branch
          %466 = sbr.rel (%p464) target = $region84
        $region83: #{tpu_custom_call.1} parent=79 // pred_region
          %467 = dma.done [#allocation8], 64
        $region84: #{tpu_custom_call.1} parent=79 // pred_fallthru
          _
        // Predicated region
        $region85: #{tpu_custom_call.1} parent=79 // pred_check
          %p468 = pneg %p200
        $region86: #{tpu_custom_call.1} parent=79 // pred_check_branch
          %470 = sbr.rel (%p468) target = $region88
        $region87: #{tpu_custom_call.1} parent=79 // pred_region
          %471 = dma.done [#allocation11], 16
        $region88: #{tpu_custom_call.1} parent=79 // pred_fallthru
          _
        %p472 = scmp.lt.s32.totalorder %s32, 1
        %s473 = scalar_select %p472, %s32, 1
        %s474 = smul.addr %s473, 8
        %s475 = scalar_lea.vmem %s0, %s474
        %p476 = pneg %p53
        %p477 = pneg %p50
        %p478 = pneg %p74
        %p479 = pneg %p71
        %p480 = pneg %p95
        %p481 = pneg %p92
        %p482 = pneg %p116
        %p483 = pneg %p113
        %p484 = pneg %p137
        %p485 = pneg %p134
        %p486 = pneg %p158
        %p487 = pneg %p155
        %p488 = pneg %p179
        %p489 = pneg %p176
        %p490 = pneg %p200
        %p491 = pneg %p197
        %p492 = pneg %p221
        %p493 = pneg %p218
        %p494 = pneg %p242
        %p495 = pneg %p239
        %p496 = pneg %p263
        %p497 = pneg %p260
        %p498 = pneg %p284
        %p499 = pneg %p281
        %p500 = pneg %p305
        %p501 = pneg %p302
        %p502 = pneg %p326
        %p503 = pneg %p323
        %p504 = pneg %p347
        %p505 = pneg %p344
        %p506 = pneg %p373
        %p507 = pneg %p370
        %s508 = sand.u32 %s360, 1
        %s509 = scalar_lea.sflag [#allocation9], %s508
        %s510 = sand.u32 %s360, 1
        %s511 = smul.addr %s510, 8
        %s512 = scalar_lea.vmem [#allocation12], %s511
        %p513 = scmp.lt.s32.totalorder %s32, 1
        %s514 = scalar_select %p513, %s32, 1
        %s515 = smul.addr %s514, 8
        %s516 = scalar_lea.vmem %s0, %s515
        %v518 = vld [vmem:[%s516] sm:$0xff]
        %v519 = vld [vmem:[#allocation7] sm:$0xf]
        %s520 = sld [smem:[#allocation6]]
        %vm521 = vcmask 261120
        %v522 = vsel %vm521, %v518, 0.0
        %523 = vadd.xlane.f32.xlu0 %v522
        %v524 = vpop.xlane.xlu0 %523
        %v525 = vrcp.pop 32.0
        %v526 = vmul.f32 %v524, %v525
        %v527 = vsub.f32 %v518, %v526
        %v528 = vmul.f32 %v527, %v527
        %v529 = vsel %vm521, %v528, 0.0
        %530 = vadd.xlane.f32.xlu0 %v529
        %v531 = vpop.xlane.xlu0 %530
        %v532 = vmul.f32 %v531, %v525
        %v533 = vadd.f32 %v532, 1e-05
        %v534 = vrsqrt.pop %v533
        %v535 = vmul.f32 %v527, %v534
        %v536 = vlaneseq
        %v537 = vshrl.u32 %v536, 7
        %v538 = vsub.s32 0, %v537
        %v539 = vrot.slane %v519, %v538
        %v540 = vmul.f32 %v535, %v539
        %v541 = vlaneseq
        %v542 = vshrl.u32 %v541, 7
        %v543 = vsub.s32 1, %v542
        %v544 = vrot.slane %v519, %v543
        %v545 = vadd.f32 %v540, %v544
        %v546 = vpack.c.bf16 %v545, %v545
        %v547 = vld [vmem:[%s2] sm:$0xf]
        %v548 = vld [vmem:[%s2 + $0x4] sm:$0xf]
        %v549 = vld [vmem:[%s2 + $0x8] sm:$0xf]
        %v550 = vld [vmem:[%s2 + $0xc] sm:$0xf]
        %v551 = vld [vmem:[%s3] sm:$0x1]
        %v553 = vlaneseq
        %v554 = vshrl.u32 %v553, 7
        %v555 = vsub.s32 0, %v554
        %v556 = vrot.slane %v551, %v555
        %v562 = vunpack.c.l.b16 %v547
        %v563 = vunpack.c.l.b16 %v548
        %v564 = vunpack.c.l.b16 %v549
        %v565 = vunpack.c.l.b16 %v550
        %v566 = vpack.c.b16 %v563, %v562
        %v567 = vpack.c.b16 %v565, %v564
        %v571 = vsel %vm521, %v546, 0
        %573 = vmatprep.subr.bf16.mxu0 0
        %574 = vmatpush1.bf16.msra.mxu0 %v566
        %575 = vmatprep.subr.bf16.mxu0 0
        %576 = vmatpush1.bf16.msra.mxu0 %v567
        %577 = vmatprep.subr.bf16.mxu0 0
        %578 = vmatpush1.bf16.msra.mxu0 0
        %579 = vmatprep.subr.bf16.mxu0 0
        %580 = vmatpush1.bf16.msra.mxu0 0
        %581 = vmatprep.subr.bf16.mxu0 0
        %582 = vmatpush1.bf16.msra.mxu0 0
        %583 = vmatprep.subr.bf16.mxu0 0
        %584 = vmatpush1.bf16.msra.mxu0 0
        %585 = vmatprep.subr.bf16.mxu0 0
        %586 = vmatpush1.bf16.msra.mxu0 0
        %587 = vmatprep.subr.bf16.mxu0 0
        %588 = vmatpush1.bf16.msra.mxu0 0
        %589 = vmatprep.subr.bf16.mxu0 0
        %590 = vmatpush1.bf16.msra.mxu0 0
        %591 = vmatprep.subr.bf16.mxu0 0
        %592 = vmatpush1.bf16.msra.mxu0 0
        %593 = vmatprep.subr.bf16.mxu0 0
        %594 = vmatpush1.bf16.msra.mxu0 0
        %595 = vmatprep.subr.bf16.mxu0 0
        %596 = vmatpush1.bf16.msra.mxu0 0
        %597 = vmatprep.subr.bf16.mxu0 0
        %598 = vmatpush1.bf16.msra.mxu0 0
        %599 = vmatprep.subr.bf16.mxu0 0
        %600 = vmatpush1.bf16.msra.mxu0 0
        %601 = vmatprep.subr.bf16.mxu0 0
        %602 = vmatpush1.bf16.msra.mxu0 0
        %603 = vmatprep.subr.bf16.mxu0 0
        %604 = vmatpush1.bf16.msra.mxu0 0
        %605 = vmatprep.mubr.bf16.mxu0 0
        %606 = vmatmul.mubr.bf16.gmra.mrb[0].mxu0 %v571
        %v607 = vpop.f32.mrb[0].mxu0
        %v608 = vadd.f32 %v556, %v607
        %v609 = vpop.f32.mrb[0].mxu0
        %v610 = vpop.f32.mrb[0].mxu0
        %v611 = vpop.f32.mrb[0].mxu0
        %612 = vdwg.mxu0
        %v613 = vpack.c.bf16 %v608, %v608
        %vm614 = vcmask 60416
        %615 = vst.msk [vmem:[#allocation2] sm:$0xf] %vm614, %v613
        %v617 = vunpack.c.l.b16 %v613
        %v618 = vpack.c.b16 %v617, %v617
        %619 = vrot.lane.b32.xlu0 %v618, 96
        %v620 = vpop.permute.xlu0 %619
        %622 = vst.msk [vmem:[#allocation3] sm:$0xf] %vm614, %v620
        %623 = vrot.lane.b32.xlu0 %v618, 64
        %v624 = vpop.permute.xlu0 %623
        %626 = vst.msk [vmem:[#allocation4] sm:$0xf] %vm614, %v624
        %627 = vrot.lane.b32.xlu0 %v618, 120
        %v628 = vpop.permute.xlu0 %627
        %s630 = scalar_lea.vmem [#allocation2], 4
        %631 = vst.msk [vmem:[%s630] sm:$0xf] %vm614, %v628
        %632 = vrot.lane.b32.xlu0 %v618, 88
        %v633 = vpop.permute.xlu0 %632
        %s635 = scalar_lea.vmem [#allocation3], 4
        %636 = vst.msk [vmem:[%s635] sm:$0xf] %vm614, %v633
        %637 = vrot.lane.b32.xlu0 %v618, 56
        %v638 = vpop.permute.xlu0 %637
        %s640 = scalar_lea.vmem [#allocation4], 4
        %641 = vst.msk [vmem:[%s640] sm:$0xf] %vm614, %v638
        %642 = vrot.lane.b32.xlu0 %v618, 112
        %v643 = vpop.permute.xlu0 %642
        %s645 = scalar_lea.vmem [#allocation2], 8
        %646 = vst.msk [vmem:[%s645] sm:$0xf] %vm614, %v643
        %647 = vrot.lane.b32.xlu0 %v618, 80
        %v648 = vpop.permute.xlu0 %647
        %s650 = scalar_lea.vmem [#allocation3], 8
        %651 = vst.msk [vmem:[%s650] sm:$0xf] %vm614, %v648
        %652 = vrot.lane.b32.xlu0 %v618, 48
        %v653 = vpop.permute.xlu0 %652
        %s655 = scalar_lea.vmem [#allocation4], 8
        %656 = vst.msk [vmem:[%s655] sm:$0xf] %vm614, %v653
        %657 = vrot.lane.b32.xlu0 %v618, 104
        %v658 = vpop.permute.xlu0 %657
        %s660 = scalar_lea.vmem [#allocation2], 12
        %661 = vst.msk [vmem:[%s660] sm:$0xf] %vm614, %v658
        %662 = vrot.lane.b32.xlu0 %v618, 72
        %v663 = vpop.permute.xlu0 %662
        %s665 = scalar_lea.vmem [#allocation3], 12
        %666 = vst.msk [vmem:[%s665] sm:$0xf] %vm614, %v663
        %667 = vrot.lane.b32.xlu0 %v618, 40
        %v668 = vpop.permute.xlu0 %667
        %s670 = scalar_lea.vmem [#allocation4], 12
        %671 = vst.msk [vmem:[%s670] sm:$0xf] %vm614, %v668
        %v672 = vld [vmem:[#allocation2] sm:$0xf]
        %v673 = vld [vmem:[#allocation2 + $0x4] sm:$0xf]
        %v674 = vld [vmem:[#allocation2 + $0x8] sm:$0xf]
        %v675 = vld [vmem:[#allocation2 + $0xc] sm:$0xf]
        %v676 = vld [vmem:[#allocation3] sm:$0xf]
        %v677 = vld [vmem:[#allocation3 + $0x4] sm:$0xf]
        %v678 = vld [vmem:[#allocation3 + $0x8] sm:$0xf]
        %v679 = vld [vmem:[#allocation3 + $0xc] sm:$0xf]
        %v680 = vld [vmem:[#allocation4] sm:$0xf]
        %v681 = vld [vmem:[#allocation4 + $0x4] sm:$0xf]
        %v682 = vld [vmem:[#allocation4 + $0x8] sm:$0xf]
        %v683 = vld [vmem:[#allocation4 + $0xc] sm:$0xf]
        %vm684 = vcmask 64512
        %v686 = vsel %vm684, %v672, 0
        %v689 = vsel %vm684, %v676, 0
        %691 = vmatprep.subr.bf16.mxu0 0
        %692 = vmatpush1.bf16.xpose.msra.mxu0 %v689
        %693 = vmatprep.subr.bf16.mxu0 0
        %694 = vmatpush1.bf16.xpose.msra.mxu0 0
        %695 = vmatprep.subr.bf16.mxu0 0
        %696 = vmatpush1.bf16.xpose.msra.mxu0 0
        %697 = vmatprep.subr.bf16.mxu0 0
        %698 = vmatpush1.bf16.xpose.msra.mxu0 0
        %699 = vmatprep.subr.bf16.mxu0 0
        %700 = vmatpush1.bf16.xpose.msra.mxu0 0
        %701 = vmatprep.subr.bf16.mxu0 0
        %702 = vmatpush1.bf16.xpose.msra.mxu0 0
        %703 = vmatprep.subr.bf16.mxu0 0
        %704 = vmatpush1.bf16.xpose.msra.mxu0 0
        %705 = vmatprep.subr.bf16.mxu0 0
        %706 = vmatpush1.bf16.xpose.msra.mxu0 0
        %707 = vmatprep.subr.bf16.mxu0 0
        %708 = vmatpush1.bf16.xpose.msra.mxu0 0
        %709 = vmatprep.subr.bf16.mxu0 0
        %710 = vmatpush1.bf16.xpose.msra.mxu0 0
        %711 = vmatprep.subr.bf16.mxu0 0
        %712 = vmatpush1.bf16.xpose.msra.mxu0 0
        %713 = vmatprep.subr.bf16.mxu0 0
        %714 = vmatpush1.bf16.xpose.msra.mxu0 0
        %715 = vmatprep.subr.bf16.mxu0 0
        %716 = vmatpush1.bf16.xpose.msra.mxu0 0
        %717 = vmatprep.subr.bf16.mxu0 0
        %718 = vmatpush1.bf16.xpose.msra.mxu0 0
        %719 = vmatprep.subr.bf16.mxu0 0
        %720 = vmatpush1.bf16.xpose.msra.mxu0 0
        %721 = vmatprep.subr.bf16.mxu0 0
        %722 = vmatpush1.bf16.xpose.msra.mxu0 0
        %723 = vmatprep.mubr.bf16.mxu0 0
        %724 = vmatmul.mubr.bf16.gmra.mrb[0].mxu0 %v686
        %v725 = vpop.f32.mrb[0].mxu0
        %v726 = vadd.f32 0.0, %v725
        %v727 = vpop.f32.mrb[0].mxu0
        %v728 = vpop.f32.mrb[0].mxu0
        %v729 = vpop.f32.mrb[0].mxu0
        %730 = vdwg.mxu0
        %v732 = vsel %vm684, %v673, 0
        %v735 = vsel %vm684, %v677, 0
        %737 = vmatprep.subr.bf16.mxu0 0
        %738 = vmatpush1.bf16.xpose.msra.mxu0 %v735
        %739 = vmatprep.subr.bf16.mxu0 0
        %740 = vmatpush1.bf16.xpose.msra.mxu0 0
        %741 = vmatprep.subr.bf16.mxu0 0
        %742 = vmatpush1.bf16.xpose.msra.mxu0 0
        %743 = vmatprep.subr.bf16.mxu0 0
        %744 = vmatpush1.bf16.xpose.msra.mxu0 0
        %745 = vmatprep.subr.bf16.mxu0 0
        %746 = vmatpush1.bf16.xpose.msra.mxu0 0
        %747 = vmatprep.subr.bf16.mxu0 0
        %748 = vmatpush1.bf16.xpose.msra.mxu0 0
        %749 = vmatprep.subr.bf16.mxu0 0
        %750 = vmatpush1.bf16.xpose.msra.mxu0 0
        %751 = vmatprep.subr.bf16.mxu0 0
        %752 = vmatpush1.bf16.xpose.msra.mxu0 0
        %753 = vmatprep.subr.bf16.mxu0 0
        %754 = vmatpush1.bf16.xpose.msra.mxu0 0
        %755 = vmatprep.subr.bf16.mxu0 0
        %756 = vmatpush1.bf16.xpose.msra.mxu0 0
        %757 = vmatprep.subr.bf16.mxu0 0
        %758 = vmatpush1.bf16.xpose.msra.mxu0 0
        %759 = vmatprep.subr.bf16.mxu0 0
        %760 = vmatpush1.bf16.xpose.msra.mxu0 0
        %761 = vmatprep.subr.bf16.mxu0 0
        %762 = vmatpush1.bf16.xpose.msra.mxu0 0
        %763 = vmatprep.subr.bf16.mxu0 0
        %764 = vmatpush1.bf16.xpose.msra.mxu0 0
        %765 = vmatprep.subr.bf16.mxu0 0
        %766 = vmatpush1.bf16.xpose.msra.mxu0 0
        %767 = vmatprep.subr.bf16.mxu0 0
        %768 = vmatpush1.bf16.xpose.msra.mxu0 0
        %769 = vmatprep.mubr.bf16.mxu0 0
        %770 = vmatmul.mubr.bf16.gmra.mrb[0].mxu0 %v732
        %v771 = vpop.f32.mrb[0].mxu0
        %v772 = vadd.f32 0.0, %v771
        %v773 = vpop.f32.mrb[0].mxu0
        %v774 = vpop.f32.mrb[0].mxu0
        %v775 = vpop.f32.mrb[0].mxu0
        %776 = vdwg.mxu0
        %v778 = vsel %vm684, %v674, 0
        %v781 = vsel %vm684, %v678, 0
        %783 = vmatprep.subr.bf16.mxu0 0
        %784 = vmatpush1.bf16.xpose.msra.mxu0 %v781
        %785 = vmatprep.subr.bf16.mxu0 0
        %786 = vmatpush1.bf16.xpose.msra.mxu0 0
        %787 = vmatprep.subr.bf16.mxu0 0
        %788 = vmatpush1.bf16.xpose.msra.mxu0 0
        %789 = vmatprep.subr.bf16.mxu0 0
        %790 = vmatpush1.bf16.xpose.msra.mxu0 0
        %791 = vmatprep.subr.bf16.mxu0 0
        %792 = vmatpush1.bf16.xpose.msra.mxu0 0
        %793 = vmatprep.subr.bf16.mxu0 0
        %794 = vmatpush1.bf16.xpose.msra.mxu0 0
        %795 = vmatprep.subr.bf16.mxu0 0
        %796 = vmatpush1.bf16.xpose.msra.mxu0 0
        %797 = vmatprep.subr.bf16.mxu0 0
        %798 = vmatpush1.bf16.xpose.msra.mxu0 0
        %799 = vmatprep.subr.bf16.mxu0 0
        %800 = vmatpush1.bf16.xpose.msra.mxu0 0
        %801 = vmatprep.subr.bf16.mxu0 0
        %802 = vmatpush1.bf16.xpose.msra.mxu0 0
        %803 = vmatprep.subr.bf16.mxu0 0
        %804 = vmatpush1.bf16.xpose.msra.mxu0 0
        %805 = vmatprep.subr.bf16.mxu0 0
        %806 = vmatpush1.bf16.xpose.msra.mxu0 0
        %807 = vmatprep.subr.bf16.mxu0 0
        %808 = vmatpush1.bf16.xpose.msra.mxu0 0
        %809 = vmatprep.subr.bf16.mxu0 0
        %810 = vmatpush1.bf16.xpose.msra.mxu0 0
        %811 = vmatprep.subr.bf16.mxu0 0
        %812 = vmatpush1.bf16.xpose.msra.mxu0 0
        %813 = vmatprep.subr.bf16.mxu0 0
        %814 = vmatpush1.bf16.xpose.msra.mxu0 0
        %815 = vmatprep.mubr.bf16.mxu0 0
        %816 = vmatmul.mubr.bf16.gmra.mrb[0].mxu0 %v778
        %v817 = vpop.f32.mrb[0].mxu0
        %v818 = vadd.f32 0.0, %v817
        %v819 = vpop.f32.mrb[0].mxu0
        %v820 = vpop.f32.mrb[0].mxu0
        %v821 = vpop.f32.mrb[0].mxu0
        %822 = vdwg.mxu0
        %v824 = vsel %vm684, %v675, 0
        %v827 = vsel %vm684, %v679, 0
        %829 = vmatprep.subr.bf16.mxu0 0
        %830 = vmatpush1.bf16.xpose.msra.mxu0 %v827
        %831 = vmatprep.subr.bf16.mxu0 0
        %832 = vmatpush1.bf16.xpose.msra.mxu0 0
        %833 = vmatprep.subr.bf16.mxu0 0
        %834 = vmatpush1.bf16.xpose.msra.mxu0 0
        %835 = vmatprep.subr.bf16.mxu0 0
        %836 = vmatpush1.bf16.xpose.msra.mxu0 0
        %837 = vmatprep.subr.bf16.mxu0 0
        %838 = vmatpush1.bf16.xpose.msra.mxu0 0
        %839 = vmatprep.subr.bf16.mxu0 0
        %840 = vmatpush1.bf16.xpose.msra.mxu0 0
        %841 = vmatprep.subr.bf16.mxu0 0
        %842 = vmatpush1.bf16.xpose.msra.mxu0 0
        %843 = vmatprep.subr.bf16.mxu0 0
        %844 = vmatpush1.bf16.xpose.msra.mxu0 0
        %845 = vmatprep.subr.bf16.mxu0 0
        %846 = vmatpush1.bf16.xpose.msra.mxu0 0
        %847 = vmatprep.subr.bf16.mxu0 0
        %848 = vmatpush1.bf16.xpose.msra.mxu0 0
        %849 = vmatprep.subr.bf16.mxu0 0
        %850 = vmatpush1.bf16.xpose.msra.mxu0 0
        %851 = vmatprep.subr.bf16.mxu0 0
        %852 = vmatpush1.bf16.xpose.msra.mxu0 0
        %853 = vmatprep.subr.bf16.mxu0 0
        %854 = vmatpush1.bf16.xpose.msra.mxu0 0
        %855 = vmatprep.subr.bf16.mxu0 0
        %856 = vmatpush1.bf16.xpose.msra.mxu0 0
        %857 = vmatprep.subr.bf16.mxu0 0
        %858 = vmatpush1.bf16.xpose.msra.mxu0 0
        %859 = vmatprep.subr.bf16.mxu0 0
        %860 = vmatpush1.bf16.xpose.msra.mxu0 0
        %861 = vmatprep.mubr.bf16.mxu0 0
        %862 = vmatmul.mubr.bf16.gmra.mrb[0].mxu0 %v824
        %v863 = vpop.f32.mrb[0].mxu0
        %v864 = vadd.f32 0.0, %v863
        %v865 = vpop.f32.mrb[0].mxu0
        %v866 = vpop.f32.mrb[0].mxu0
        %v867 = vpop.f32.mrb[0].mxu0
        %868 = vdwg.mxu0
        %v869 = vsel %vm684, %v726, -inf
        %870 = vmax.xlane.f32.xlu0 %v869
        %v871 = vpop.xlane.xlu0 %870
        %v872 = vsel %vm684, %v772, -inf
        %873 = vmax.xlane.f32.xlu0 %v872
        %v874 = vpop.xlane.xlu0 %873
        %v875 = vsel %vm684, %v818, -inf
        %876 = vmax.xlane.f32.xlu0 %v875
        %v877 = vpop.xlane.xlu0 %876
        %v878 = vsel %vm684, %v864, -inf
        %879 = vmax.xlane.f32.xlu0 %v878
        %v880 = vpop.xlane.xlu0 %879
        %v881 = vsub.f32 %v726, %v871
        %v882 = vsub.f32 %v772, %v874
        %v883 = vsub.f32 %v818, %v877
        %v884 = vsub.f32 %v864, %v880
        %v885 = vmul.f32 %v881, 1.442695
        %v886 = vpow.pop %v885
        %v887 = vmul.f32 %v882, 1.442695
        %v888 = vpow.pop %v887
        %v889 = vmul.f32 %v883, 1.442695
        %v890 = vpow.pop %v889
        %v891 = vmul.f32 %v884, 1.442695
        %v892 = vpow.pop %v891
        %v893 = vsel %vm684, %v886, 0.0
        %894 = vadd.xlane.f32.xlu0 %v893
        %v895 = vpop.xlane.xlu0 %894
        %v896 = vsel %vm684, %v888, 0.0
        %897 = vadd.xlane.f32.xlu0 %v896
        %v898 = vpop.xlane.xlu0 %897
        %v899 = vsel %vm684, %v890, 0.0
        %900 = vadd.xlane.f32.xlu0 %v899
        %v901 = vpop.xlane.xlu0 %900
        %v902 = vsel %vm684, %v892, 0.0
        %903 = vadd.xlane.f32.xlu0 %v902
        %v904 = vpop.xlane.xlu0 %903
        %v905 = vrcp.pop %v895
        %v906 = vrcp.pop %v898
        %v907 = vrcp.pop %v901
        %v908 = vrcp.pop %v904
        %v909 = vmul.f32 %v886, %v905
        %v910 = vmul.f32 %v888, %v906
        %v911 = vmul.f32 %v890, %v907
        %v912 = vmul.f32 %v892, %v908
        %v913 = vpack.c.bf16 %v909, %v909
        %v914 = vpack.c.bf16 %v910, %v910
        %v915 = vpack.c.bf16 %v911, %v911
        %v916 = vpack.c.bf16 %v912, %v912
        %v918 = vsel %vm684, %v913, 0
        %vm920 = vcmask 1043456
        %v922 = vsel %vm920, %v680, 0
        %924 = vmatprep.subr.bf16.mxu0 0
        %925 = vmatpush1.bf16.msra.mxu0 %v922
        %926 = vmatprep.subr.bf16.mxu0 0
        %927 = vmatpush1.bf16.msra.mxu0 0
        %928 = vmatprep.subr.bf16.mxu0 0
        %929 = vmatpush1.bf16.msra.mxu0 0
        %930 = vmatprep.subr.bf16.mxu0 0
        %931 = vmatpush1.bf16.msra.mxu0 0
        %932 = vmatprep.subr.bf16.mxu0 0
        %933 = vmatpush1.bf16.msra.mxu0 0
        %934 = vmatprep.subr.bf16.mxu0 0
        %935 = vmatpush1.bf16.msra.mxu0 0
        %936 = vmatprep.subr.bf16.mxu0 0
        %937 = vmatpush1.bf16.msra.mxu0 0
        %938 = vmatprep.subr.bf16.mxu0 0
        %939 = vmatpush1.bf16.msra.mxu0 0
        %940 = vmatprep.subr.bf16.mxu0 0
        %941 = vmatpush1.bf16.msra.mxu0 0
        %942 = vmatprep.subr.bf16.mxu0 0
        %943 = vmatpush1.bf16.msra.mxu0 0
        %944 = vmatprep.subr.bf16.mxu0 0
        %945 = vmatpush1.bf16.msra.mxu0 0
        %946 = vmatprep.subr.bf16.mxu0 0
        %947 = vmatpush1.bf16.msra.mxu0 0
        %948 = vmatprep.subr.bf16.mxu0 0
        %949 = vmatpush1.bf16.msra.mxu0 0
        %950 = vmatprep.subr.bf16.mxu0 0
        %951 = vmatpush1.bf16.msra.mxu0 0
        %952 = vmatprep.subr.bf16.mxu0 0
        %953 = vmatpush1.bf16.msra.mxu0 0
        %954 = vmatprep.subr.bf16.mxu0 0
        %955 = vmatpush1.bf16.msra.mxu0 0
        %956 = vmatprep.mubr.bf16.mxu0 0
        %957 = vmatmul.mubr.bf16.gmra.mrb[0].mxu0 %v918
        %v958 = vpop.f32.mrb[0].mxu0
        %v959 = vadd.f32 0.0, %v958
        %v960 = vpop.f32.mrb[0].mxu0
        %v961 = vpop.f32.mrb[0].mxu0
        %v962 = vpop.f32.mrb[0].mxu0
        %963 = vdwg.mxu0
        %v965 = vsel %vm684, %v914, 0
        %v968 = vsel %vm920, %v681, 0
        %970 = vmatprep.subr.bf16.mxu0 0
        %971 = vmatpush1.bf16.msra.mxu0 %v968
        %972 = vmatprep.subr.bf16.mxu0 0
        %973 = vmatpush1.bf16.msra.mxu0 0
        %974 = vmatprep.subr.bf16.mxu0 0
        %975 = vmatpush1.bf16.msra.mxu0 0
        %976 = vmatprep.subr.bf16.mxu0 0
        %977 = vmatpush1.bf16.msra.mxu0 0
        %978 = vmatprep.subr.bf16.mxu0 0
        %979 = vmatpush1.bf16.msra.mxu0 0
        %980 = vmatprep.subr.bf16.mxu0 0
        %981 = vmatpush1.bf16.msra.mxu0 0
        %982 = vmatprep.subr.bf16.mxu0 0
        %983 = vmatpush1.bf16.msra.mxu0 0
        %984 = vmatprep.subr.bf16.mxu0 0
        %985 = vmatpush1.bf16.msra.mxu0 0
        %986 = vmatprep.subr.bf16.mxu0 0
        %987 = vmatpush1.bf16.msra.mxu0 0
        %988 = vmatprep.subr.bf16.mxu0 0
        %989 = vmatpush1.bf16.msra.mxu0 0
        %990 = vmatprep.subr.bf16.mxu0 0
        %991 = vmatpush1.bf16.msra.mxu0 0
        %992 = vmatprep.subr.bf16.mxu0 0
        %993 = vmatpush1.bf16.msra.mxu0 0
        %994 = vmatprep.subr.bf16.mxu0 0
        %995 = vmatpush1.bf16.msra.mxu0 0
        %996 = vmatprep.subr.bf16.mxu0 0
        %997 = vmatpush1.bf16.msra.mxu0 0
        %998 = vmatprep.subr.bf16.mxu0 0
        %999 = vmatpush1.bf16.msra.mxu0 0
        %1000 = vmatprep.subr.bf16.mxu0 0
        %1001 = vmatpush1.bf16.msra.mxu0 0
        %1002 = vmatprep.mubr.bf16.mxu0 0
        %1003 = vmatmul.mubr.bf16.gmra.mrb[0].mxu0 %v965
        %v1004 = vpop.f32.mrb[0].mxu0
        %v1005 = vadd.f32 0.0, %v1004
        %v1006 = vpop.f32.mrb[0].mxu0
        %v1007 = vpop.f32.mrb[0].mxu0
        %v1008 = vpop.f32.mrb[0].mxu0
        %1009 = vdwg.mxu0
        %v1011 = vsel %vm684, %v915, 0
        %v1014 = vsel %vm920, %v682, 0
        %1016 = vmatprep.subr.bf16.mxu0 0
        %1017 = vmatpush1.bf16.msra.mxu0 %v1014
        %1018 = vmatprep.subr.bf16.mxu0 0
        %1019 = vmatpush1.bf16.msra.mxu0 0
        %1020 = vmatprep.subr.bf16.mxu0 0
        %1021 = vmatpush1.bf16.msra.mxu0 0
        %1022 = vmatprep.subr.bf16.mxu0 0
        %1023 = vmatpush1.bf16.msra.mxu0 0
        %1024 = vmatprep.subr.bf16.mxu0 0
        %1025 = vmatpush1.bf16.msra.mxu0 0
        %1026 = vmatprep.subr.bf16.mxu0 0
        %1027 = vmatpush1.bf16.msra.mxu0 0
        %1028 = vmatprep.subr.bf16.mxu0 0
        %1029 = vmatpush1.bf16.msra.mxu0 0
        %1030 = vmatprep.subr.bf16.mxu0 0
        %1031 = vmatpush1.bf16.msra.mxu0 0
        %1032 = vmatprep.subr.bf16.mxu0 0
        %1033 = vmatpush1.bf16.msra.mxu0 0
        %1034 = vmatprep.subr.bf16.mxu0 0
        %1035 = vmatpush1.bf16.msra.mxu0 0
        %1036 = vmatprep.subr.bf16.mxu0 0
        %1037 = vmatpush1.bf16.msra.mxu0 0
        %1038 = vmatprep.subr.bf16.mxu0 0
        %1039 = vmatpush1.bf16.msra.mxu0 0
        %1040 = vmatprep.subr.bf16.mxu0 0
        %1041 = vmatpush1.bf16.msra.mxu0 0
        %1042 = vmatprep.subr.bf16.mxu0 0
        %1043 = vmatpush1.bf16.msra.mxu0 0
        %1044 = vmatprep.subr.bf16.mxu0 0
        %1045 = vmatpush1.bf16.msra.mxu0 0
        %1046 = vmatprep.subr.bf16.mxu0 0
        %1047 = vmatpush1.bf16.msra.mxu0 0
        %1048 = vmatprep.mubr.bf16.mxu0 0
        %1049 = vmatmul.mubr.bf16.gmra.mrb[0].mxu0 %v1011
        %v1050 = vpop.f32.mrb[0].mxu0
        %v1051 = vadd.f32 0.0, %v1050
        %v1052 = vpop.f32.mrb[0].mxu0
        %v1053 = vpop.f32.mrb[0].mxu0
        %v1054 = vpop.f32.mrb[0].mxu0
        %1055 = vdwg.mxu0
        %v1057 = vsel %vm684, %v916, 0
        %v1060 = vsel %vm920, %v683, 0
        %1062 = vmatprep.subr.bf16.mxu0 0
        %1063 = vmatpush1.bf16.msra.mxu0 %v1060
        %1064 = vmatprep.subr.bf16.mxu0 0
        %1065 = vmatpush1.bf16.msra.mxu0 0
        %1066 = vmatprep.subr.bf16.mxu0 0
        %1067 = vmatpush1.bf16.msra.mxu0 0
        %1068 = vmatprep.subr.bf16.mxu0 0
        %1069 = vmatpush1.bf16.msra.mxu0 0
        %1070 = vmatprep.subr.bf16.mxu0 0
        %1071 = vmatpush1.bf16.msra.mxu0 0
        %1072 = vmatprep.subr.bf16.mxu0 0
        %1073 = vmatpush1.bf16.msra.mxu0 0
        %1074 = vmatprep.subr.bf16.mxu0 0
        %1075 = vmatpush1.bf16.msra.mxu0 0
        %1076 = vmatprep.subr.bf16.mxu0 0
        %1077 = vmatpush1.bf16.msra.mxu0 0
        %1078 = vmatprep.subr.bf16.mxu0 0
        %1079 = vmatpush1.bf16.msra.mxu0 0
        %1080 = vmatprep.subr.bf16.mxu0 0
        %1081 = vmatpush1.bf16.msra.mxu0 0
        %1082 = vmatprep.subr.bf16.mxu0 0
        %1083 = vmatpush1.bf16.msra.mxu0 0
        %1084 = vmatprep.subr.bf16.mxu0 0
        %1085 = vmatpush1.bf16.msra.mxu0 0
        %1086 = vmatprep.subr.bf16.mxu0 0
        %1087 = vmatpush1.bf16.msra.mxu0 0
        %1088 = vmatprep.subr.bf16.mxu0 0
        %1089 = vmatpush1.bf16.msra.mxu0 0
        %1090 = vmatprep.subr.bf16.mxu0 0
        %1091 = vmatpush1.bf16.msra.mxu0 0
        %1092 = vmatprep.subr.bf16.mxu0 0
        %1093 = vmatpush1.bf16.msra.mxu0 0
        %1094 = vmatprep.mubr.bf16.mxu0 0
        %1095 = vmatmul.mubr.bf16.gmra.mrb[0].mxu0 %v1057
        %v1096 = vpop.f32.mrb[0].mxu0
        %v1097 = vadd.f32 0.0, %v1096
        %v1098 = vpop.f32.mrb[0].mxu0
        %v1099 = vpop.f32.mrb[0].mxu0
        %v1100 = vpop.f32.mrb[0].mxu0
        %1101 = vdwg.mxu0
        %1102 = vst.msk [vmem:[#allocation5] sm:$0xff] %vm684, %v959
        %1104 = vrot.lane.b32.xlu0 %v1005, 8
        %v1105 = vpop.permute.xlu0 %1104
        %vm1107 = vcmask 130112
        %1108 = vst.msk [vmem:[#allocation5] sm:$0xff] %vm1107, %v1105
        %1110 = vrot.lane.b32.xlu0 %v1051, 16
        %v1111 = vpop.permute.xlu0 %1110
        %vm1113 = vcmask 195712
        %1114 = vst.msk [vmem:[#allocation5] sm:$0xff] %vm1113, %v1111
        %1116 = vrot.lane.b32.xlu0 %v1097, 24
        %v1117 = vpop.permute.xlu0 %1116
        %vm1119 = vcmask 261312
        %1120 = vst.msk [vmem:[#allocation5] sm:$0xff] %vm1119, %v1117
        %v1121 = vld [vmem:[#allocation5] sm:$0xff]
        %v1122 = vpack.c.bf16 %v1121, %v1121
        %v1123 = vld [vmem:[%s4] sm:$0xf]
        %v1124 = vld [vmem:[%s4 + $0x4] sm:$0xf]
        %v1125 = vld [vmem:[%s4 + $0x8] sm:$0xf]
        %v1126 = vld [vmem:[%s4 + $0xc] sm:$0xf]
        %v1127 = vld [vmem:[%s5] sm:$0x1]
        %v1129 = vlaneseq
        %v1130 = vshrl.u32 %v1129, 7
        %v1131 = vsub.s32 0, %v1130
        %v1132 = vrot.slane %v1127, %v1131
        %v1138 = vunpack.c.l.b16 %v1123
        %v1139 = vunpack.c.l.b16 %v1124
        %v1140 = vunpack.c.l.b16 %v1125
        %v1141 = vunpack.c.l.b16 %v1126
        %v1142 = vpack.c.b16 %v1139, %v1138
        %v1143 = vpack.c.b16 %v1141, %v1140
        %v1147 = vsel %vm521, %v1122, 0
        %1149 = vmatprep.subr.bf16.mxu0 0
        %1150 = vmatpush1.bf16.msra.mxu0 %v1142
        %1151 = vmatprep.subr.bf16.mxu0 0
        %1152 = vmatpush1.bf16.msra.mxu0 %v1143
        %1153 = vmatprep.subr.bf16.mxu0 0
        %1154 = vmatpush1.bf16.msra.mxu0 0
        %1155 = vmatprep.subr.bf16.mxu0 0
        %1156 = vmatpush1.bf16.msra.mxu0 0
        %1157 = vmatprep.subr.bf16.mxu0 0
        %1158 = vmatpush1.bf16.msra.mxu0 0
        %1159 = vmatprep.subr.bf16.mxu0 0
        %1160 = vmatpush1.bf16.msra.mxu0 0
        %1161 = vmatprep.subr.bf16.mxu0 0
        %1162 = vmatpush1.bf16.msra.mxu0 0
        %1163 = vmatprep.subr.bf16.mxu0 0
        %1164 = vmatpush1.bf16.msra.mxu0 0
        %1165 = vmatprep.subr.bf16.mxu0 0
        %1166 = vmatpush1.bf16.msra.mxu0 0
        %1167 = vmatprep.subr.bf16.mxu0 0
        %1168 = vmatpush1.bf16.msra.mxu0 0
        %1169 = vmatprep.subr.bf16.mxu0 0
        %1170 = vmatpush1.bf16.msra.mxu0 0
        %1171 = vmatprep.subr.bf16.mxu0 0
        %1172 = vmatpush1.bf16.msra.mxu0 0
        %1173 = vmatprep.subr.bf16.mxu0 0
        %1174 = vmatpush1.bf16.msra.mxu0 0
        %1175 = vmatprep.subr.bf16.mxu0 0
        %1176 = vmatpush1.bf16.msra.mxu0 0
        %1177 = vmatprep.subr.bf16.mxu0 0
        %1178 = vmatpush1.bf16.msra.mxu0 0
        %1179 = vmatprep.subr.bf16.mxu0 0
        %1180 = vmatpush1.bf16.msra.mxu0 0
        %1181 = vmatprep.mubr.bf16.mxu0 0
        %1182 = vmatmul.mubr.bf16.gmra.mrb[0].mxu0 %v1147
        %v1183 = vpop.f32.mrb[0].mxu0
        %v1184 = vadd.f32 %v1132, %v1183
        %v1185 = vpop.f32.mrb[0].mxu0
        %v1186 = vpop.f32.mrb[0].mxu0
        %v1187 = vpop.f32.mrb[0].mxu0
        %1188 = vdwg.mxu0
        %v1189 = vstv %s520
        %v1190 = vmul.f32 %v1189, %v1184
        %v1191 = vadd.f32 %v518, %v1190
        %v1192 = vlaneseq
        %v1193 = vshrl.u32 %v1192, 7
        %v1194 = vsub.s32 2, %v1193
        %v1195 = vrot.slane %v519, %v1194
        %v1196 = vmul.f32 %v535, %v1195
        %v1197 = vlaneseq
        %v1198 = vshrl.u32 %v1197, 7
        %v1199 = vsub.s32 3, %v1198
        %v1200 = vrot.slane %v519, %v1199
        %v1201 = vadd.f32 %v1196, %v1200
        %v1202 = vpack.c.bf16 %v1201, %v1201
        %v1203 = vld [vmem:[%s6] sm:$0xf]
        %v1204 = vld [vmem:[%s6 + $0x4] sm:$0xf]
        %v1205 = vld [vmem:[%s6 + $0x8] sm:$0xf]
        %v1206 = vld [vmem:[%s6 + $0xc] sm:$0xf]
        %v1207 = vld [vmem:[#allocation10] sm:$0x1]
        %v1209 = vlaneseq
        %v1210 = vshrl.u32 %v1209, 7
        %v1211 = vsub.s32 0, %v1210
        %v1212 = vrot.slane %v1207, %v1211
        %v1218 = vunpack.c.l.b16 %v1203
        %v1219 = vunpack.c.l.b16 %v1204
        %v1220 = vunpack.c.l.b16 %v1205
        %v1221 = vunpack.c.l.b16 %v1206
        %v1222 = vpack.c.b16 %v1219, %v1218
        %v1223 = vpack.c.b16 %v1221, %v1220
        %v1227 = vsel %vm521, %v1202, 0
        %1229 = vmatprep.subr.bf16.mxu0 0
        %1230 = vmatpush1.bf16.msra.mxu0 %v1222
        %1231 = vmatprep.subr.bf16.mxu0 0
        %1232 = vmatpush1.bf16.msra.mxu0 %v1223
        %1233 = vmatprep.subr.bf16.mxu0 0
        %1234 = vmatpush1.bf16.msra.mxu0 0
        %1235 = vmatprep.subr.bf16.mxu0 0
        %1236 = vmatpush1.bf16.msra.mxu0 0
        %1237 = vmatprep.subr.bf16.mxu0 0
        %1238 = vmatpush1.bf16.msra.mxu0 0
        %1239 = vmatprep.subr.bf16.mxu0 0
        %1240 = vmatpush1.bf16.msra.mxu0 0
        %1241 = vmatprep.subr.bf16.mxu0 0
        %1242 = vmatpush1.bf16.msra.mxu0 0
        %1243 = vmatprep.subr.bf16.mxu0 0
        %1244 = vmatpush1.bf16.msra.mxu0 0
        %1245 = vmatprep.subr.bf16.mxu0 0
        %1246 = vmatpush1.bf16.msra.mxu0 0
        %1247 = vmatprep.subr.bf16.mxu0 0
        %1248 = vmatpush1.bf16.msra.mxu0 0
        %1249 = vmatprep.subr.bf16.mxu0 0
        %1250 = vmatpush1.bf16.msra.mxu0 0
        %1251 = vmatprep.subr.bf16.mxu0 0
        %1252 = vmatpush1.bf16.msra.mxu0 0
        %1253 = vmatprep.subr.bf16.mxu0 0
        %1254 = vmatpush1.bf16.msra.mxu0 0
        %1255 = vmatprep.subr.bf16.mxu0 0
        %1256 = vmatpush1.bf16.msra.mxu0 0
        %1257 = vmatprep.subr.bf16.mxu0 0
        %1258 = vmatpush1.bf16.msra.mxu0 0
        %1259 = vmatprep.subr.bf16.mxu0 0
        %1260 = vmatpush1.bf16.msra.mxu0 0
        %1261 = vmatprep.mubr.bf16.mxu0 0
        %1262 = vmatmul.mubr.bf16.gmra.mrb[0].mxu0 %v1227
        %v1263 = vpop.f32.mrb[0].mxu0
        %v1264 = vadd.f32 %v1212, %v1263
        %v1265 = vpop.f32.mrb[0].mxu0
        %v1266 = vpop.f32.mrb[0].mxu0
        %v1267 = vpop.f32.mrb[0].mxu0
        %1268 = vdwg.mxu0
        %v1269 = vpack.c.bf16 %v1264, %v1264
        %1270 = vst.msk [vmem:[#allocation2] sm:$0xf] %vm614, %v1269
        %v1272 = vunpack.c.l.b16 %v1269
        %v1273 = vpack.c.b16 %v1272, %v1272
        %1274 = vrot.lane.b32.xlu0 %v1273, 96
        %v1275 = vpop.permute.xlu0 %1274
        %1277 = vst.msk [vmem:[#allocation3] sm:$0xf] %vm614, %v1275
        %1278 = vrot.lane.b32.xlu0 %v1273, 64
        %v1279 = vpop.permute.xlu0 %1278
        %1281 = vst.msk [vmem:[#allocation4] sm:$0xf] %vm614, %v1279
        %1282 = vrot.lane.b32.xlu0 %v1273, 120
        %v1283 = vpop.permute.xlu0 %1282
        %1285 = vst.msk [vmem:[%s630] sm:$0xf] %vm614, %v1283
        %1286 = vrot.lane.b32.xlu0 %v1273, 88
        %v1287 = vpop.permute.xlu0 %1286
        %1289 = vst.msk [vmem:[%s635] sm:$0xf] %vm614, %v1287
        %1290 = vrot.lane.b32.xlu0 %v1273, 56
        %v1291 = vpop.permute.xlu0 %1290
        %1293 = vst.msk [vmem:[%s640] sm:$0xf] %vm614, %v1291
        %1294 = vrot.lane.b32.xlu0 %v1273, 112
        %v1295 = vpop.permute.xlu0 %1294
        %1297 = vst.msk [vmem:[%s645] sm:$0xf] %vm614, %v1295
        %1298 = vrot.lane.b32.xlu0 %v1273, 80
        %v1299 = vpop.permute.xlu0 %1298
        %1301 = vst.msk [vmem:[%s650] sm:$0xf] %vm614, %v1299
        %1302 = vrot.lane.b32.xlu0 %v1273, 48
        %v1303 = vpop.permute.xlu0 %1302
        %1305 = vst.msk [vmem:[%s655] sm:$0xf] %vm614, %v1303
        %1306 = vrot.lane.b32.xlu0 %v1273, 104
        %v1307 = vpop.permute.xlu0 %1306
        %1309 = vst.msk [vmem:[%s660] sm:$0xf] %vm614, %v1307
        %1310 = vrot.lane.b32.xlu0 %v1273, 72
        %v1311 = vpop.permute.xlu0 %1310
        %1313 = vst.msk [vmem:[%s665] sm:$0xf] %vm614, %v1311
        %1314 = vrot.lane.b32.xlu0 %v1273, 40
        %v1315 = vpop.permute.xlu0 %1314
        %1317 = vst.msk [vmem:[%s670] sm:$0xf] %vm614, %v1315
        %v1318 = vld [vmem:[#allocation2] sm:$0xf]
        %v1319 = vld [vmem:[#allocation2 + $0x4] sm:$0xf]
        %v1320 = vld [vmem:[#allocation2 + $0x8] sm:$0xf]
        %v1321 = vld [vmem:[#allocation2 + $0xc] sm:$0xf]
        %v1322 = vld [vmem:[#allocation3] sm:$0xf]
        %v1323 = vld [vmem:[#allocation3 + $0x4] sm:$0xf]
        %v1324 = vld [vmem:[#allocation3 + $0x8] sm:$0xf]
        %v1325 = vld [vmem:[#allocation3 + $0xc] sm:$0xf]
        %v1326 = vld [vmem:[#allocation4] sm:$0xf]
        %v1327 = vld [vmem:[#allocation4 + $0x4] sm:$0xf]
        %v1328 = vld [vmem:[#allocation4 + $0x8] sm:$0xf]
        %v1329 = vld [vmem:[#allocation4 + $0xc] sm:$0xf]
        %v1331 = vsel %vm684, %v1318, 0
        %v1334 = vsel %vm684, %v1322, 0
        %1336 = vmatprep.subr.bf16.mxu0 0
        %1337 = vmatpush1.bf16.xpose.msra.mxu0 %v1334
        %1338 = vmatprep.subr.bf16.mxu0 0
        %1339 = vmatpush1.bf16.xpose.msra.mxu0 0
        %1340 = vmatprep.subr.bf16.mxu0 0
        %1341 = vmatpush1.bf16.xpose.msra.mxu0 0
        %1342 = vmatprep.subr.bf16.mxu0 0
        %1343 = vmatpush1.bf16.xpose.msra.mxu0 0
        %1344 = vmatprep.subr.bf16.mxu0 0
        %1345 = vmatpush1.bf16.xpose.msra.mxu0 0
        %1346 = vmatprep.subr.bf16.mxu0 0
        %1347 = vmatpush1.bf16.xpose.msra.mxu0 0
        %1348 = vmatprep.subr.bf16.mxu0 0
        %1349 = vmatpush1.bf16.xpose.msra.mxu0 0
        %1350 = vmatprep.subr.bf16.mxu0 0
        %1351 = vmatpush1.bf16.xpose.msra.mxu0 0
        %1352 = vmatprep.subr.bf16.mxu0 0
        %1353 = vmatpush1.bf16.xpose.msra.mxu0 0
        %1354 = vmatprep.subr.bf16.mxu0 0
        %1355 = vmatpush1.bf16.xpose.msra.mxu0 0
        %1356 = vmatprep.subr.bf16.mxu0 0
        %1357 = vmatpush1.bf16.xpose.msra.mxu0 0
        %1358 = vmatprep.subr.bf16.mxu0 0
        %1359 = vmatpush1.bf16.xpose.msra.mxu0 0
        %1360 = vmatprep.subr.bf16.mxu0 0
        %1361 = vmatpush1.bf16.xpose.msra.mxu0 0
        %1362 = vmatprep.subr.bf16.mxu0 0
        %1363 = vmatpush1.bf16.xpose.msra.mxu0 0
        %1364 = vmatprep.subr.bf16.mxu0 0
        %1365 = vmatpush1.bf16.xpose.msra.mxu0 0
        %1366 = vmatprep.subr.bf16.mxu0 0
        %1367 = vmatpush1.bf16.xpose.msra.mxu0 0
        %1368 = vmatprep.mubr.bf16.mxu0 0
        %1369 = vmatmul.mubr.bf16.gmra.mrb[0].mxu0 %v1331
        %v1370 = vpop.f32.mrb[0].mxu0
        %v1371 = vadd.f32 0.0, %v1370
        %v1372 = vpop.f32.mrb[0].mxu0
        %v1373 = vpop.f32.mrb[0].mxu0
        %v1374 = vpop.f32.mrb[0].mxu0
        %1375 = vdwg.mxu0
        %v1377 = vsel %vm684, %v1319, 0
        %v1380 = vsel %vm684, %v1323, 0
        %1382 = vmatprep.subr.bf16.mxu0 0
        %1383 = vmatpush1.bf16.xpose.msra.mxu0 %v1380
        %1384 = vmatprep.subr.bf16.mxu0 0
        %1385 = vmatpush1.bf16.xpose.msra.mxu0 0
        %1386 = vmatprep.subr.bf16.mxu0 0
        %1387 = vmatpush1.bf16.xpose.msra.mxu0 0
        %1388 = vmatprep.subr.bf16.mxu0 0
        %1389 = vmatpush1.bf16.xpose.msra.mxu0 0
        %1390 = vmatprep.subr.bf16.mxu0 0
        %1391 = vmatpush1.bf16.xpose.msra.mxu0 0
        %1392 = vmatprep.subr.bf16.mxu0 0
        %1393 = vmatpush1.bf16.xpose.msra.mxu0 0
        %1394 = vmatprep.subr.bf16.mxu0 0
        %1395 = vmatpush1.bf16.xpose.msra.mxu0 0
        %1396 = vmatprep.subr.bf16.mxu0 0
        %1397 = vmatpush1.bf16.xpose.msra.mxu0 0
        %1398 = vmatprep.subr.bf16.mxu0 0
        %1399 = vmatpush1.bf16.xpose.msra.mxu0 0
        %1400 = vmatprep.subr.bf16.mxu0 0
        %1401 = vmatpush1.bf16.xpose.msra.mxu0 0
        %1402 = vmatprep.subr.bf16.mxu0 0
        %1403 = vmatpush1.bf16.xpose.msra.mxu0 0
        %1404 = vmatprep.subr.bf16.mxu0 0
        %1405 = vmatpush1.bf16.xpose.msra.mxu0 0
        %1406 = vmatprep.subr.bf16.mxu0 0
        %1407 = vmatpush1.bf16.xpose.msra.mxu0 0
        %1408 = vmatprep.subr.bf16.mxu0 0
        %1409 = vmatpush1.bf16.xpose.msra.mxu0 0
        %1410 = vmatprep.subr.bf16.mxu0 0
        %1411 = vmatpush1.bf16.xpose.msra.mxu0 0
        %1412 = vmatprep.subr.bf16.mxu0 0
        %1413 = vmatpush1.bf16.xpose.msra.mxu0 0
        %1414 = vmatprep.mubr.bf16.mxu0 0
        %1415 = vmatmul.mubr.bf16.gmra.mrb[0].mxu0 %v1377
        %v1416 = vpop.f32.mrb[0].mxu0
        %v1417 = vadd.f32 0.0, %v1416
        %v1418 = vpop.f32.mrb[0].mxu0
        %v1419 = vpop.f32.mrb[0].mxu0
        %v1420 = vpop.f32.mrb[0].mxu0
        %1421 = vdwg.mxu0
        %v1423 = vsel %vm684, %v1320, 0
        %v1426 = vsel %vm684, %v1324, 0
        %1428 = vmatprep.subr.bf16.mxu0 0
        %1429 = vmatpush1.bf16.xpose.msra.mxu0 %v1426
        %1430 = vmatprep.subr.bf16.mxu0 0
        %1431 = vmatpush1.bf16.xpose.msra.mxu0 0
        %1432 = vmatprep.subr.bf16.mxu0 0
        %1433 = vmatpush1.bf16.xpose.msra.mxu0 0
        %1434 = vmatprep.subr.bf16.mxu0 0
        %1435 = vmatpush1.bf16.xpose.msra.mxu0 0
        %1436 = vmatprep.subr.bf16.mxu0 0
        %1437 = vmatpush1.bf16.xpose.msra.mxu0 0
        %1438 = vmatprep.subr.bf16.mxu0 0
        %1439 = vmatpush1.bf16.xpose.msra.mxu0 0
        %1440 = vmatprep.subr.bf16.mxu0 0
        %1441 = vmatpush1.bf16.xpose.msra.mxu0 0
        %1442 = vmatprep.subr.bf16.mxu0 0
        %1443 = vmatpush1.bf16.xpose.msra.mxu0 0
        %1444 = vmatprep.subr.bf16.mxu0 0
        %1445 = vmatpush1.bf16.xpose.msra.mxu0 0
        %1446 = vmatprep.subr.bf16.mxu0 0
        %1447 = vmatpush1.bf16.xpose.msra.mxu0 0
        %1448 = vmatprep.subr.bf16.mxu0 0
        %1449 = vmatpush1.bf16.xpose.msra.mxu0 0
        %1450 = vmatprep.subr.bf16.mxu0 0
        %1451 = vmatpush1.bf16.xpose.msra.mxu0 0
        %1452 = vmatprep.subr.bf16.mxu0 0
        %1453 = vmatpush1.bf16.xpose.msra.mxu0 0
        %1454 = vmatprep.subr.bf16.mxu0 0
        %1455 = vmatpush1.bf16.xpose.msra.mxu0 0
        %1456 = vmatprep.subr.bf16.mxu0 0
        %1457 = vmatpush1.bf16.xpose.msra.mxu0 0
        %1458 = vmatprep.subr.bf16.mxu0 0
        %1459 = vmatpush1.bf16.xpose.msra.mxu0 0
        %1460 = vmatprep.mubr.bf16.mxu0 0
        %1461 = vmatmul.mubr.bf16.gmra.mrb[0].mxu0 %v1423
        %v1462 = vpop.f32.mrb[0].mxu0
        %v1463 = vadd.f32 0.0, %v1462
        %v1464 = vpop.f32.mrb[0].mxu0
        %v1465 = vpop.f32.mrb[0].mxu0
        %v1466 = vpop.f32.mrb[0].mxu0
        %1467 = vdwg.mxu0
        %v1469 = vsel %vm684, %v1321, 0
        %v1472 = vsel %vm684, %v1325, 0
        %1474 = vmatprep.subr.bf16.mxu0 0
        %1475 = vmatpush1.bf16.xpose.msra.mxu0 %v1472
        %1476 = vmatprep.subr.bf16.mxu0 0
        %1477 = vmatpush1.bf16.xpose.msra.mxu0 0
        %1478 = vmatprep.subr.bf16.mxu0 0
        %1479 = vmatpush1.bf16.xpose.msra.mxu0 0
        %1480 = vmatprep.subr.bf16.mxu0 0
        %1481 = vmatpush1.bf16.xpose.msra.mxu0 0
        %1482 = vmatprep.subr.bf16.mxu0 0
        %1483 = vmatpush1.bf16.xpose.msra.mxu0 0
        %1484 = vmatprep.subr.bf16.mxu0 0
        %1485 = vmatpush1.bf16.xpose.msra.mxu0 0
        %1486 = vmatprep.subr.bf16.mxu0 0
        %1487 = vmatpush1.bf16.xpose.msra.mxu0 0
        %1488 = vmatprep.subr.bf16.mxu0 0
        %1489 = vmatpush1.bf16.xpose.msra.mxu0 0
        %1490 = vmatprep.subr.bf16.mxu0 0
        %1491 = vmatpush1.bf16.xpose.msra.mxu0 0
        %1492 = vmatprep.subr.bf16.mxu0 0
        %1493 = vmatpush1.bf16.xpose.msra.mxu0 0
        %1494 = vmatprep.subr.bf16.mxu0 0
        %1495 = vmatpush1.bf16.xpose.msra.mxu0 0
        %1496 = vmatprep.subr.bf16.mxu0 0
        %1497 = vmatpush1.bf16.xpose.msra.mxu0 0
        %1498 = vmatprep.subr.bf16.mxu0 0
        %1499 = vmatpush1.bf16.xpose.msra.mxu0 0
        %1500 = vmatprep.subr.bf16.mxu0 0
        %1501 = vmatpush1.bf16.xpose.msra.mxu0 0
        %1502 = vmatprep.subr.bf16.mxu0 0
        %1503 = vmatpush1.bf16.xpose.msra.mxu0 0
        %1504 = vmatprep.subr.bf16.mxu0 0
        %1505 = vmatpush1.bf16.xpose.msra.mxu0 0
        %1506 = vmatprep.mubr.bf16.mxu0 0
        %1507 = vmatmul.mubr.bf16.gmra.mrb[0].mxu0 %v1469
        %v1508 = vpop.f32.mrb[0].mxu0
        %v1509 = vadd.f32 0.0, %v1508
        %v1510 = vpop.f32.mrb[0].mxu0
        %v1511 = vpop.f32.mrb[0].mxu0
        %v1512 = vpop.f32.mrb[0].mxu0
        %1513 = vdwg.mxu0
        %v1514 = vsel %vm684, %v1371, -inf
        %1515 = vmax.xlane.f32.xlu0 %v1514
        %v1516 = vpop.xlane.xlu0 %1515
        %v1517 = vsel %vm684, %v1417, -inf
        %1518 = vmax.xlane.f32.xlu0 %v1517
        %v1519 = vpop.xlane.xlu0 %1518
        %v1520 = vsel %vm684, %v1463, -inf
        %1521 = vmax.xlane.f32.xlu0 %v1520
        %v1522 = vpop.xlane.xlu0 %1521
        %v1523 = vsel %vm684, %v1509, -inf
        %1524 = vmax.xlane.f32.xlu0 %v1523
        %v1525 = vpop.xlane.xlu0 %1524
        %v1526 = vsub.f32 %v1371, %v1516
        %v1527 = vsub.f32 %v1417, %v1519
        %v1528 = vsub.f32 %v1463, %v1522
        %v1529 = vsub.f32 %v1509, %v1525
        %v1530 = vmul.f32 %v1526, 1.442695
        %v1531 = vpow.pop %v1530
        %v1532 = vmul.f32 %v1527, 1.442695
        %v1533 = vpow.pop %v1532
        %v1534 = vmul.f32 %v1528, 1.442695
        %v1535 = vpow.pop %v1534
        %v1536 = vmul.f32 %v1529, 1.442695
        %v1537 = vpow.pop %v1536
        %v1538 = vsel %vm684, %v1531, 0.0
        %1539 = vadd.xlane.f32.xlu0 %v1538
        %v1540 = vpop.xlane.xlu0 %1539
        %v1541 = vsel %vm684, %v1533, 0.0
        %1542 = vadd.xlane.f32.xlu0 %v1541
        %v1543 = vpop.xlane.xlu0 %1542
        %v1544 = vsel %vm684, %v1535, 0.0
        %1545 = vadd.xlane.f32.xlu0 %v1544
        %v1546 = vpop.xlane.xlu0 %1545
        %v1547 = vsel %vm684, %v1537, 0.0
        %1548 = vadd.xlane.f32.xlu0 %v1547
        %v1549 = vpop.xlane.xlu0 %1548
        %v1550 = vrcp.pop %v1540
        %v1551 = vrcp.pop %v1543
        %v1552 = vrcp.pop %v1546
        %v1553 = vrcp.pop %v1549
        %v1554 = vmul.f32 %v1531, %v1550
        %v1555 = vmul.f32 %v1533, %v1551
        %v1556 = vmul.f32 %v1535, %v1552
        %v1557 = vmul.f32 %v1537, %v1553
        %v1558 = vpack.c.bf16 %v1554, %v1554
        %v1559 = vpack.c.bf16 %v1555, %v1555
        %v1560 = vpack.c.bf16 %v1556, %v1556
        %v1561 = vpack.c.bf16 %v1557, %v1557
        %v1563 = vsel %vm684, %v1558, 0
        %v1566 = vsel %vm920, %v1326, 0
        %1568 = vmatprep.subr.bf16.mxu0 0
        %1569 = vmatpush1.bf16.msra.mxu0 %v1566
        %1570 = vmatprep.subr.bf16.mxu0 0
        %1571 = vmatpush1.bf16.msra.mxu0 0
        %1572 = vmatprep.subr.bf16.mxu0 0
        %1573 = vmatpush1.bf16.msra.mxu0 0
        %1574 = vmatprep.subr.bf16.mxu0 0
        %1575 = vmatpush1.bf16.msra.mxu0 0
        %1576 = vmatprep.subr.bf16.mxu0 0
        %1577 = vmatpush1.bf16.msra.mxu0 0
        %1578 = vmatprep.subr.bf16.mxu0 0
        %1579 = vmatpush1.bf16.msra.mxu0 0
        %1580 = vmatprep.subr.bf16.mxu0 0
        %1581 = vmatpush1.bf16.msra.mxu0 0
        %1582 = vmatprep.subr.bf16.mxu0 0
        %1583 = vmatpush1.bf16.msra.mxu0 0
        %1584 = vmatprep.subr.bf16.mxu0 0
        %1585 = vmatpush1.bf16.msra.mxu0 0
        %1586 = vmatprep.subr.bf16.mxu0 0
        %1587 = vmatpush1.bf16.msra.mxu0 0
        %1588 = vmatprep.subr.bf16.mxu0 0
        %1589 = vmatpush1.bf16.msra.mxu0 0
        %1590 = vmatprep.subr.bf16.mxu0 0
        %1591 = vmatpush1.bf16.msra.mxu0 0
        %1592 = vmatprep.subr.bf16.mxu0 0
        %1593 = vmatpush1.bf16.msra.mxu0 0
        %1594 = vmatprep.subr.bf16.mxu0 0
        %1595 = vmatpush1.bf16.msra.mxu0 0
        %1596 = vmatprep.subr.bf16.mxu0 0
        %1597 = vmatpush1.bf16.msra.mxu0 0
        %1598 = vmatprep.subr.bf16.mxu0 0
        %1599 = vmatpush1.bf16.msra.mxu0 0
        %1600 = vmatprep.mubr.bf16.mxu0 0
        %1601 = vmatmul.mubr.bf16.gmra.mrb[0].mxu0 %v1563
        %v1602 = vpop.f32.mrb[0].mxu0
        %v1603 = vadd.f32 0.0, %v1602
        %v1604 = vpop.f32.mrb[0].mxu0
        %v1605 = vpop.f32.mrb[0].mxu0
        %v1606 = vpop.f32.mrb[0].mxu0
        %1607 = vdwg.mxu0
        %v1609 = vsel %vm684, %v1559, 0
        %v1612 = vsel %vm920, %v1327, 0
        %1614 = vmatprep.subr.bf16.mxu0 0
        %1615 = vmatpush1.bf16.msra.mxu0 %v1612
        %1616 = vmatprep.subr.bf16.mxu0 0
        %1617 = vmatpush1.bf16.msra.mxu0 0
        %1618 = vmatprep.subr.bf16.mxu0 0
        %1619 = vmatpush1.bf16.msra.mxu0 0
        %1620 = vmatprep.subr.bf16.mxu0 0
        %1621 = vmatpush1.bf16.msra.mxu0 0
        %1622 = vmatprep.subr.bf16.mxu0 0
        %1623 = vmatpush1.bf16.msra.mxu0 0
        %1624 = vmatprep.subr.bf16.mxu0 0
        %1625 = vmatpush1.bf16.msra.mxu0 0
        %1626 = vmatprep.subr.bf16.mxu0 0
        %1627 = vmatpush1.bf16.msra.mxu0 0
        %1628 = vmatprep.subr.bf16.mxu0 0
        %1629 = vmatpush1.bf16.msra.mxu0 0
        %1630 = vmatprep.subr.bf16.mxu0 0
        %1631 = vmatpush1.bf16.msra.mxu0 0
        %1632 = vmatprep.subr.bf16.mxu0 0
        %1633 = vmatpush1.bf16.msra.mxu0 0
        %1634 = vmatprep.subr.bf16.mxu0 0
        %1635 = vmatpush1.bf16.msra.mxu0 0
        %1636 = vmatprep.subr.bf16.mxu0 0
        %1637 = vmatpush1.bf16.msra.mxu0 0
        %1638 = vmatprep.subr.bf16.mxu0 0
        %1639 = vmatpush1.bf16.msra.mxu0 0
        %1640 = vmatprep.subr.bf16.mxu0 0
        %1641 = vmatpush1.bf16.msra.mxu0 0
        %1642 = vmatprep.subr.bf16.mxu0 0
        %1643 = vmatpush1.bf16.msra.mxu0 0
        %1644 = vmatprep.subr.bf16.mxu0 0
        %1645 = vmatpush1.bf16.msra.mxu0 0
        %1646 = vmatprep.mubr.bf16.mxu0 0
        %1647 = vmatmul.mubr.bf16.gmra.mrb[0].mxu0 %v1609
        %v1648 = vpop.f32.mrb[0].mxu0
        %v1649 = vadd.f32 0.0, %v1648
        %v1650 = vpop.f32.mrb[0].mxu0
        %v1651 = vpop.f32.mrb[0].mxu0
        %v1652 = vpop.f32.mrb[0].mxu0
        %1653 = vdwg.mxu0
        %v1655 = vsel %vm684, %v1560, 0
        %v1658 = vsel %vm920, %v1328, 0
        %1660 = vmatprep.subr.bf16.mxu0 0
        %1661 = vmatpush1.bf16.msra.mxu0 %v1658
        %1662 = vmatprep.subr.bf16.mxu0 0
        %1663 = vmatpush1.bf16.msra.mxu0 0
        %1664 = vmatprep.subr.bf16.mxu0 0
        %1665 = vmatpush1.bf16.msra.mxu0 0
        %1666 = vmatprep.subr.bf16.mxu0 0
        %1667 = vmatpush1.bf16.msra.mxu0 0
        %1668 = vmatprep.subr.bf16.mxu0 0
        %1669 = vmatpush1.bf16.msra.mxu0 0
        %1670 = vmatprep.subr.bf16.mxu0 0
        %1671 = vmatpush1.bf16.msra.mxu0 0
        %1672 = vmatprep.subr.bf16.mxu0 0
        %1673 = vmatpush1.bf16.msra.mxu0 0
        %1674 = vmatprep.subr.bf16.mxu0 0
        %1675 = vmatpush1.bf16.msra.mxu0 0
        %1676 = vmatprep.subr.bf16.mxu0 0
        %1677 = vmatpush1.bf16.msra.mxu0 0
        %1678 = vmatprep.subr.bf16.mxu0 0
        %1679 = vmatpush1.bf16.msra.mxu0 0
        %1680 = vmatprep.subr.bf16.mxu0 0
        %1681 = vmatpush1.bf16.msra.mxu0 0
        %1682 = vmatprep.subr.bf16.mxu0 0
        %1683 = vmatpush1.bf16.msra.mxu0 0
        %1684 = vmatprep.subr.bf16.mxu0 0
        %1685 = vmatpush1.bf16.msra.mxu0 0
        %1686 = vmatprep.subr.bf16.mxu0 0
        %1687 = vmatpush1.bf16.msra.mxu0 0
        %1688 = vmatprep.subr.bf16.mxu0 0
        %1689 = vmatpush1.bf16.msra.mxu0 0
        %1690 = vmatprep.subr.bf16.mxu0 0
        %1691 = vmatpush1.bf16.msra.mxu0 0
        %1692 = vmatprep.mubr.bf16.mxu0 0
        %1693 = vmatmul.mubr.bf16.gmra.mrb[0].mxu0 %v1655
        %v1694 = vpop.f32.mrb[0].mxu0
        %v1695 = vadd.f32 0.0, %v1694
        %v1696 = vpop.f32.mrb[0].mxu0
        %v1697 = vpop.f32.mrb[0].mxu0
        %v1698 = vpop.f32.mrb[0].mxu0
        %1699 = vdwg.mxu0
        %v1701 = vsel %vm684, %v1561, 0
        %v1704 = vsel %vm920, %v1329, 0
        %1706 = vmatprep.subr.bf16.mxu0 0
        %1707 = vmatpush1.bf16.msra.mxu0 %v1704
        %1708 = vmatprep.subr.bf16.mxu0 0
        %1709 = vmatpush1.bf16.msra.mxu0 0
        %1710 = vmatprep.subr.bf16.mxu0 0
        %1711 = vmatpush1.bf16.msra.mxu0 0
        %1712 = vmatprep.subr.bf16.mxu0 0
        %1713 = vmatpush1.bf16.msra.mxu0 0
        %1714 = vmatprep.subr.bf16.mxu0 0
        %1715 = vmatpush1.bf16.msra.mxu0 0
        %1716 = vmatprep.subr.bf16.mxu0 0
        %1717 = vmatpush1.bf16.msra.mxu0 0
        %1718 = vmatprep.subr.bf16.mxu0 0
        %1719 = vmatpush1.bf16.msra.mxu0 0
        %1720 = vmatprep.subr.bf16.mxu0 0
        %1721 = vmatpush1.bf16.msra.mxu0 0
        %1722 = vmatprep.subr.bf16.mxu0 0
        %1723 = vmatpush1.bf16.msra.mxu0 0
        %1724 = vmatprep.subr.bf16.mxu0 0
        %1725 = vmatpush1.bf16.msra.mxu0 0
        %1726 = vmatprep.subr.bf16.mxu0 0
        %1727 = vmatpush1.bf16.msra.mxu0 0
        %1728 = vmatprep.subr.bf16.mxu0 0
        %1729 = vmatpush1.bf16.msra.mxu0 0
        %1730 = vmatprep.subr.bf16.mxu0 0
        %1731 = vmatpush1.bf16.msra.mxu0 0
        %1732 = vmatprep.subr.bf16.mxu0 0
        %1733 = vmatpush1.bf16.msra.mxu0 0
        %1734 = vmatprep.subr.bf16.mxu0 0
        %1735 = vmatpush1.bf16.msra.mxu0 0
        %1736 = vmatprep.subr.bf16.mxu0 0
        %1737 = vmatpush1.bf16.msra.mxu0 0
        %1738 = vmatprep.mubr.bf16.mxu0 0
        %1739 = vmatmul.mubr.bf16.gmra.mrb[0].mxu0 %v1701
        %v1740 = vpop.f32.mrb[0].mxu0
        %v1741 = vadd.f32 0.0, %v1740
        %v1742 = vpop.f32.mrb[0].mxu0
        %v1743 = vpop.f32.mrb[0].mxu0
        %v1744 = vpop.f32.mrb[0].mxu0
        %1745 = vdwg.mxu0
        %1746 = vst.msk [vmem:[#allocation5] sm:$0xff] %vm684, %v1603
        %1748 = vrot.lane.b32.xlu0 %v1649, 8
        %v1749 = vpop.permute.xlu0 %1748
        %1751 = vst.msk [vmem:[#allocation5] sm:$0xff] %vm1107, %v1749
        %1753 = vrot.lane.b32.xlu0 %v1695, 16
        %v1754 = vpop.permute.xlu0 %1753
        %1756 = vst.msk [vmem:[#allocation5] sm:$0xff] %vm1113, %v1754
        %1758 = vrot.lane.b32.xlu0 %v1741, 24
        %v1759 = vpop.permute.xlu0 %1758
        %1761 = vst.msk [vmem:[#allocation5] sm:$0xff] %vm1119, %v1759
        %v1762 = vld [vmem:[#allocation5] sm:$0xff]
        %v1763 = vpack.c.bf16 %v1762, %v1762
        %v1764 = vld [vmem:[%s8] sm:$0xf]
        %v1765 = vld [vmem:[%s8 + $0x4] sm:$0xf]
        %v1766 = vld [vmem:[%s8 + $0x8] sm:$0xf]
        %v1767 = vld [vmem:[%s8 + $0xc] sm:$0xf]
        %v1768 = vld [vmem:[%s9] sm:$0x1]
        %v1770 = vlaneseq
        %v1771 = vshrl.u32 %v1770, 7
        %v1772 = vsub.s32 0, %v1771
        %v1773 = vrot.slane %v1768, %v1772
        %v1779 = vunpack.c.l.b16 %v1764
        %v1780 = vunpack.c.l.b16 %v1765
        %v1781 = vunpack.c.l.b16 %v1766
        %v1782 = vunpack.c.l.b16 %v1767
        %v1783 = vpack.c.b16 %v1780, %v1779
        %v1784 = vpack.c.b16 %v1782, %v1781
        %v1788 = vsel %vm521, %v1763, 0
        %1790 = vmatprep.subr.bf16.mxu0 0
        %1791 = vmatpush1.bf16.msra.mxu0 %v1783
        %1792 = vmatprep.subr.bf16.mxu0 0
        %1793 = vmatpush1.bf16.msra.mxu0 %v1784
        %1794 = vmatprep.subr.bf16.mxu0 0
        %1795 = vmatpush1.bf16.msra.mxu0 0
        %1796 = vmatprep.subr.bf16.mxu0 0
        %1797 = vmatpush1.bf16.msra.mxu0 0
        %1798 = vmatprep.subr.bf16.mxu0 0
        %1799 = vmatpush1.bf16.msra.mxu0 0
        %1800 = vmatprep.subr.bf16.mxu0 0
        %1801 = vmatpush1.bf16.msra.mxu0 0
        %1802 = vmatprep.subr.bf16.mxu0 0
        %1803 = vmatpush1.bf16.msra.mxu0 0
        %1804 = vmatprep.subr.bf16.mxu0 0
        %1805 = vmatpush1.bf16.msra.mxu0 0
        %1806 = vmatprep.subr.bf16.mxu0 0
        %1807 = vmatpush1.bf16.msra.mxu0 0
        %1808 = vmatprep.subr.bf16.mxu0 0
        %1809 = vmatpush1.bf16.msra.mxu0 0
        %1810 = vmatprep.subr.bf16.mxu0 0
        %1811 = vmatpush1.bf16.msra.mxu0 0
        %1812 = vmatprep.subr.bf16.mxu0 0
        %1813 = vmatpush1.bf16.msra.mxu0 0
        %1814 = vmatprep.subr.bf16.mxu0 0
        %1815 = vmatpush1.bf16.msra.mxu0 0
        %1816 = vmatprep.subr.bf16.mxu0 0
        %1817 = vmatpush1.bf16.msra.mxu0 0
        %1818 = vmatprep.subr.bf16.mxu0 0
        %1819 = vmatpush1.bf16.msra.mxu0 0
        %1820 = vmatprep.subr.bf16.mxu0 0
        %1821 = vmatpush1.bf16.msra.mxu0 0
        %1822 = vmatprep.mubr.bf16.mxu0 0
        %1823 = vmatmul.mubr.bf16.gmra.mrb[0].mxu0 %v1788
        %v1824 = vpop.f32.mrb[0].mxu0
        %v1825 = vadd.f32 %v1773, %v1824
        %v1826 = vpop.f32.mrb[0].mxu0
        %v1827 = vpop.f32.mrb[0].mxu0
        %v1828 = vpop.f32.mrb[0].mxu0
        %1829 = vdwg.mxu0
        %s1830 = ssub.f32 1.0, %s520
        %v1831 = vstv %s1830
        %v1832 = vmul.f32 %v1831, %v1825
        %v1833 = vadd.f32 %v1191, %v1832
        %v1834 = vsel %vm521, %v1833, 0.0
        %1835 = vadd.xlane.f32.xlu0 %v1834
        %v1836 = vpop.xlane.xlu0 %1835
        %v1837 = vmul.f32 %v1836, %v525
        %v1838 = vsub.f32 %v1833, %v1837
        %v1839 = vmul.f32 %v1838, %v1838
        %v1840 = vsel %vm521, %v1839, 0.0
        %1841 = vadd.xlane.f32.xlu0 %v1840
        %v1842 = vpop.xlane.xlu0 %1841
        %v1843 = vmul.f32 %v1842, %v525
        %v1844 = vadd.f32 %v1843, 1e-05
        %v1845 = vrsqrt.pop %v1844
        %v1846 = vmul.f32 %v1838, %v1845
        %v1847 = vmul.f32 %v1846, %v1195
        %v1848 = vadd.f32 %v1847, %v1200
        %v1849 = vpack.c.bf16 %v1848, %v1848
        %v1850 = vld [vmem:[%s11] sm:$0xf]
        %v1851 = vld [vmem:[%s11 + $0x4] sm:$0xf]
        %v1852 = vld [vmem:[%s11 + $0x8] sm:$0xf]
        %v1853 = vld [vmem:[%s11 + $0xc] sm:$0xf]
        %v1854 = vld [vmem:[%s12] sm:$0x1]
        %v1856 = vlaneseq
        %v1857 = vshrl.u32 %v1856, 7
        %v1858 = vsub.s32 0, %v1857
        %v1859 = vrot.slane %v1854, %v1858
        %v1865 = vunpack.c.l.b16 %v1850
        %v1866 = vunpack.c.l.b16 %v1851
        %v1867 = vunpack.c.l.b16 %v1852
        %v1868 = vunpack.c.l.b16 %v1853
        %v1869 = vpack.c.b16 %v1866, %v1865
        %v1870 = vpack.c.b16 %v1868, %v1867
        %v1874 = vsel %vm521, %v1849, 0
        %1876 = vmatprep.subr.bf16.mxu0 0
        %1877 = vmatpush1.bf16.msra.mxu0 %v1869
        %1878 = vmatprep.subr.bf16.mxu0 0
        %1879 = vmatpush1.bf16.msra.mxu0 %v1870
        %1880 = vmatprep.subr.bf16.mxu0 0
        %1881 = vmatpush1.bf16.msra.mxu0 0
        %1882 = vmatprep.subr.bf16.mxu0 0
        %1883 = vmatpush1.bf16.msra.mxu0 0
        %1884 = vmatprep.subr.bf16.mxu0 0
        %1885 = vmatpush1.bf16.msra.mxu0 0
        %1886 = vmatprep.subr.bf16.mxu0 0
        %1887 = vmatpush1.bf16.msra.mxu0 0
        %1888 = vmatprep.subr.bf16.mxu0 0
        %1889 = vmatpush1.bf16.msra.mxu0 0
        %1890 = vmatprep.subr.bf16.mxu0 0
        %1891 = vmatpush1.bf16.msra.mxu0 0
        %1892 = vmatprep.subr.bf16.mxu0 0
        %1893 = vmatpush1.bf16.msra.mxu0 0
        %1894 = vmatprep.subr.bf16.mxu0 0
        %1895 = vmatpush1.bf16.msra.mxu0 0
        %1896 = vmatprep.subr.bf16.mxu0 0
        %1897 = vmatpush1.bf16.msra.mxu0 0
        %1898 = vmatprep.subr.bf16.mxu0 0
        %1899 = vmatpush1.bf16.msra.mxu0 0
        %1900 = vmatprep.subr.bf16.mxu0 0
        %1901 = vmatpush1.bf16.msra.mxu0 0
        %1902 = vmatprep.subr.bf16.mxu0 0
        %1903 = vmatpush1.bf16.msra.mxu0 0
        %1904 = vmatprep.subr.bf16.mxu0 0
        %1905 = vmatpush1.bf16.msra.mxu0 0
        %1906 = vmatprep.subr.bf16.mxu0 0
        %1907 = vmatpush1.bf16.msra.mxu0 0
        %1908 = vmatprep.mubr.bf16.mxu0 0
        %1909 = vmatmul.mubr.bf16.gmra.mrb[0].mxu0 %v1874
        %v1910 = vpop.f32.mrb[0].mxu0
        %v1911 = vadd.f32 %v1859, %v1910
        %v1912 = vpop.f32.mrb[0].mxu0
        %v1913 = vpop.f32.mrb[0].mxu0
        %v1914 = vpop.f32.mrb[0].mxu0
        %1915 = vdwg.mxu0
        %v1916 = vmax.f32 %v1911, 0.0
        %v1917 = vpack.c.bf16 %v1916, %v1916
        %v1918 = vld [vmem:[%s13] sm:$0xf]
        %v1919 = vld [vmem:[%s13 + $0x4] sm:$0xf]
        %v1920 = vld [vmem:[%s13 + $0x8] sm:$0xf]
        %v1921 = vld [vmem:[%s13 + $0xc] sm:$0xf]
        %v1922 = vld [vmem:[%s13 + $0x10] sm:$0xf]
        %v1923 = vld [vmem:[%s13 + $0x14] sm:$0xf]
        %v1924 = vld [vmem:[%s13 + $0x18] sm:$0xf]
        %v1925 = vld [vmem:[%s13 + $0x1c] sm:$0xf]
        %v1926 = vld [vmem:[%s13 + $0x20] sm:$0xf]
        %v1927 = vld [vmem:[%s13 + $0x24] sm:$0xf]
        %v1928 = vld [vmem:[%s13 + $0x28] sm:$0xf]
        %v1929 = vld [vmem:[%s13 + $0x2c] sm:$0xf]
        %v1930 = vld [vmem:[%s13 + $0x30] sm:$0xf]
        %v1931 = vld [vmem:[%s13 + $0x34] sm:$0xf]
        %v1932 = vld [vmem:[%s13 + $0x38] sm:$0xf]
        %v1933 = vld [vmem:[%s13 + $0x3c] sm:$0xf]
        %v1934 = vld [vmem:[%s14] sm:$0x1]
        %v1936 = vlaneseq
        %v1937 = vshrl.u32 %v1936, 7
        %v1938 = vsub.s32 0, %v1937
        %v1939 = vrot.slane %v1934, %v1938
        %v1957 = vunpack.c.l.b16 %v1918
        %v1958 = vunpack.c.l.b16 %v1919
        %v1959 = vunpack.c.l.b16 %v1920
        %v1960 = vunpack.c.l.b16 %v1921
        %v1961 = vunpack.c.l.b16 %v1922
        %v1962 = vunpack.c.l.b16 %v1923
        %v1963 = vunpack.c.l.b16 %v1924
        %v1964 = vunpack.c.l.b16 %v1925
        %v1965 = vunpack.c.l.b16 %v1926
        %v1966 = vunpack.c.l.b16 %v1927
        %v1967 = vunpack.c.l.b16 %v1928
        %v1968 = vunpack.c.l.b16 %v1929
        %v1969 = vunpack.c.l.b16 %v1930
        %v1970 = vunpack.c.l.b16 %v1931
        %v1971 = vunpack.c.l.b16 %v1932
        %v1972 = vunpack.c.l.b16 %v1933
        %v1973 = vpack.c.b16 %v1958, %v1957
        %v1974 = vpack.c.b16 %v1960, %v1959
        %v1975 = vpack.c.b16 %v1962, %v1961
        %v1976 = vpack.c.b16 %v1964, %v1963
        %v1977 = vpack.c.b16 %v1966, %v1965
        %v1978 = vpack.c.b16 %v1968, %v1967
        %v1979 = vpack.c.b16 %v1970, %v1969
        %v1980 = vpack.c.b16 %v1972, %v1971
        %1989 = vmatprep.subr.bf16.mxu0 0
        %1990 = vmatpush1.bf16.msra.mxu0 %v1973
        %1991 = vmatprep.subr.bf16.mxu0 0
        %1992 = vmatpush1.bf16.msra.mxu0 %v1974
        %1993 = vmatprep.subr.bf16.mxu0 0
        %1994 = vmatpush1.bf16.msra.mxu0 %v1975
        %1995 = vmatprep.subr.bf16.mxu0 0
        %1996 = vmatpush1.bf16.msra.mxu0 %v1976
        %1997 = vmatprep.subr.bf16.mxu0 0
        %1998 = vmatpush1.bf16.msra.mxu0 %v1977
        %1999 = vmatprep.subr.bf16.mxu0 0
        %2000 = vmatpush1.bf16.msra.mxu0 %v1978
        %2001 = vmatprep.subr.bf16.mxu0 0
        %2002 = vmatpush1.bf16.msra.mxu0 %v1979
        %2003 = vmatprep.subr.bf16.mxu0 0
        %2004 = vmatpush1.bf16.msra.mxu0 %v1980
        %2005 = vmatprep.subr.bf16.mxu0 0
        %2006 = vmatpush1.bf16.msra.mxu0 0
        %2007 = vmatprep.subr.bf16.mxu0 0
        %2008 = vmatpush1.bf16.msra.mxu0 0
        %2009 = vmatprep.subr.bf16.mxu0 0
        %2010 = vmatpush1.bf16.msra.mxu0 0
        %2011 = vmatprep.subr.bf16.mxu0 0
        %2012 = vmatpush1.bf16.msra.mxu0 0
        %2013 = vmatprep.subr.bf16.mxu0 0
        %2014 = vmatpush1.bf16.msra.mxu0 0
        %2015 = vmatprep.subr.bf16.mxu0 0
        %2016 = vmatpush1.bf16.msra.mxu0 0
        %2017 = vmatprep.subr.bf16.mxu0 0
        %2018 = vmatpush1.bf16.msra.mxu0 0
        %2019 = vmatprep.subr.bf16.mxu0 0
        %2020 = vmatpush1.bf16.msra.mxu0 0
        %2021 = vmatprep.mubr.bf16.mxu0 0
        %2022 = vmatmul.mubr.bf16.gmra.mrb[0].mxu0 %v1917
        %v2023 = vpop.f32.mrb[0].mxu0
        %v2024 = vadd.f32 %v1939, %v2023
        %v2025 = vpop.f32.mrb[0].mxu0
        %v2026 = vpop.f32.mrb[0].mxu0
        %v2027 = vpop.f32.mrb[0].mxu0
        %2028 = vdwg.mxu0
        %v2029 = vadd.f32 %v1833, %v2024
        %2030 = vst.msk [vmem:[%s512] sm:$0xff] %vm521, %v2029
        %s2031 = sand.u32 %s360, 1
        %s2032 = scalar_lea.sflag [#allocation9], %s2031
        %s2033 = sand.u32 %s360, 1
        %s2034 = smul.addr %s2033, 8
        %s2035 = scalar_lea.vmem [#allocation12], %s2034
        // Predicated region
        $region89: #{tpu_custom_call.1} parent=79 // pred_check
          %p2036 = pneg %p370
        $region90: #{tpu_custom_call.1} parent=79 // pred_check_branch
          %2038 = sbr.rel (%p2036) target = $region92
        $region91: #{tpu_custom_call.1} parent=79 // pred_region
          %s2040 = ssub.s32 128, 128
          %2041 = vsyncadd %s2032, %s2040
          %s2042 = smul.addr %s32, 128
          %s2043 = scalar_lea.hbm %s15, %s2042
          %s2045 = sshll.u32 %s2035, 4
          %s2046 = int_to_ptr.vmem [resolvable:$true] %s2045
          %2048 = dma.vmem_to_hbm [thread:$0]  %s2046, 128, %s2043, %s2032
        $region92: #{tpu_custom_call.1} parent=79 // pred_fallthru
          _
      $region80: #{tpu_custom_call.1} parent=5 // pred_fallthru
        _
      %p2049 = scmp.le.s32.totalorder 2, %s27
      // Predicated region
      $region93: #{tpu_custom_call.1} parent=5 // pred_check
        %p2050 = pneg %p2049
      $region94: #{tpu_custom_call.1} parent=5 // pred_check_branch
        %2052 = sbr.rel (%p2050) target = $region96
      $region95: #{tpu_custom_call.1} parent=5 // pred_region
        %s2053 = ssub.s32 %s27, 2
        // Predicated region
        $region97: #{tpu_custom_call.1} parent=95 // pred_check
          %p2054 = pneg %p376
        $region98: #{tpu_custom_call.1} parent=95 // pred_check_branch
          %2056 = sbr.rel (%p2054) target = $region100
        $region99: #{tpu_custom_call.1} parent=95 // pred_region
          %s2057 = sand.u32 %s361, 1
          %s2058 = scalar_lea.sflag [#allocation9], %s2057
          %s2059 = sand.u32 %s361, 1
          %s2060 = smul.addr %s2059, 8
          %s2061 = scalar_lea.vmem [#allocation12], %s2060
          %2062 = dma.done %s2058, 128
        $region100: #{tpu_custom_call.1} parent=95 // pred_fallthru
          _
      $region96: #{tpu_custom_call.1} parent=5 // pred_fallthru
        _
    $region6: #{tpu_custom_call.1} parent=1 // loop_footer
      %s31 = sadd.s32 1, %s27
    $region7: #{tpu_custom_call.1} parent=1 // loop_footer_branch
      %26 = sbr.rel target = $region3
    $region8: #{tpu_custom_call.1} parent=1 // loop_exit
      _
    %2063 = vsyncpa [#allocation8], 1
    %s2064 = scalar_lea.sflag [#allocation8], 1
    %2065 = vsyncpa %s2064, 1
    %2066 = vsyncpa [#allocation11], 1
    %2067 = vsyncpa [#allocation9], 1
    %s2068 = scalar_lea.sflag [#allocation9], 1
    %2069 = vsyncpa %s2068, 1

</llo_original>
